<compile_context>
chip_gen: v7x
topology: tpu7x:2x2x1
jax: 0.10.0
libtpu: 0.0.40
codegen_flags: <defaults>
</compile_context>

<pallas_src>
import jax
import jax.numpy as jnp
from jax.experimental import pallas as pl
from jax.experimental.pallas import tpu as pltpu

# ---- Model hyper-parameters: AgentNet(height=16, states_num=8), 16x16 input ----
HEIGHT = 16
WIDTH = 16
STATES_NUM = 8
BATCH = 2

K1 = 4                     # conv1 kernel size
C1 = 32                    # conv1 out channels
OH = HEIGHT - K1 + 1       # 13
OW = WIDTH - K1 + 1        # 13
P = OH * OW                # 169 spatial positions after conv1
P_PAD = 256                # zero-padded to a multiple of 128 lanes (vreg aligned)
KK = K1 * K1               # 16 conv1 taps
K2 = HEIGHT - K1 + 1       # conv2 kernel size (13) -> conv2 output is 1x1
C2 = 32                    # conv2 out channels


def _make_kernel(n):
    """Kernel for a static batch size `n`; whole batch in a single grid step."""

    def kernel(pt_ref, w1_ref, b1_ref, w2_ref, b2_ref, w3_ref, b3_ref,
               out_ref, h_ref):
        # pt_ref : (KK, n*P_PAD)   im2col patches (taps x [sample, position])
        # w1_ref : (C1, KK)        conv1 weight as a GEMM matrix
        # b1_ref : (C1, 1)         conv1 bias
        # w2_ref : (C2, C1, P_PAD) conv2 weight, lane-dense, zero-padded along P
        # b2_ref : (C2, 1)         conv2 bias
        # w3_ref : (S, C2)         fc1 weight (PyTorch layout)
        # b3_ref : (S, 1)          fc1 bias
        # out_ref: (S, n)          transposed output (wrapper transposes back)
        # h_ref  : (C2, n)         VMEM scratch holding conv2 pre-activations

        # conv1: ONE MXU GEMM for the whole batch, + bias, ReLU (VPU).
        a1 = jnp.dot(w1_ref[...], pt_ref[...],
                     preferred_element_type=jnp.float32)          # (C1, n*P_PAD)
        a1 = jnp.maximum(a1 + b1_ref[...], 0.0)

        # conv2: contract over (c1, p) jointly. w2 is loaded from VMEM once; per
        # sample we do a leading-dim broadcast multiply (VPU) and two minor-dim
        # reductions (XLU).  n is small and static, so this Python loop unrolls.
        w2 = w2_ref[...]                                          # (C2, C1, P_PAD)
        for b in range(n):
            a1_b = a1[:, b * P_PAD:(b + 1) * P_PAD]               # (C1, P_PAD), vreg-aligned
            s = jnp.sum(w2 * a1_b[None, :, :], axis=-1)           # (C2, C1)
            h_ref[:, b:b + 1] = jnp.sum(s, axis=-1, keepdims=True)  # (C2, 1)

        # flatten (spatial is 1x1) + bias + ReLU, then fc1 as one batched GEMM.
        h = jnp.maximum(h_ref[...] + b2_ref[...], 0.0)            # (C2, n)
        out_ref[...] = (jnp.dot(w3_ref[...], h,
                                preferred_element_type=jnp.float32)
                        + b3_ref[...])                            # (S, n)

    return kernel


@jax.jit
def agentnet_forward(x, w1, b1, w2, b2, w3, b3):
    """x: (N, 1, H, W) NCHW, params in PyTorch layout. Returns (N, STATES_NUM)."""
    n = x.shape[0]

    # ---- glue (pure data movement in XLA) ----
    # im2col patches: pt[k, b*P_PAD + p] with tap k = ki*K1 + kj and spatial
    # position p = i*OW + j, zero-padded along p to P_PAD so each sample's slab
    # is vreg-aligned inside the kernel.
    cols = [x[:, 0, ki:ki + OH, kj:kj + OW] for ki in range(K1) for kj in range(K1)]
    pt = jnp.stack(cols, axis=1).reshape(n, KK, P).astype(jnp.float32)   # (n, KK, P)
    pt = jnp.pad(pt, ((0, 0), (0, 0), (0, P_PAD - P)))                   # (n, KK, P_PAD)
    pt = jnp.transpose(pt, (1, 0, 2)).reshape(KK, n * P_PAD)             # (KK, n*P_PAD)

    w1m = w1.reshape(C1, KK).astype(jnp.float32)                         # (32, 16)
    b1m = b1.reshape(C1, 1).astype(jnp.float32)
    # conv2 weight lane-dense: (C2, C1, P_PAD), zero-padded along P so the padded
    # conv1 columns (which hold relu(bias) != 0) contribute nothing.
    w2m = w2.reshape(C2, C1, P).astype(jnp.float32)
    w2m = jnp.pad(w2m, ((0, 0), (0, 0), (0, P_PAD - P)))                 # (32, 32, 256)
    b2m = b2.reshape(C2, 1).astype(jnp.float32)
    w3m = w3.astype(jnp.float32)                                         # (S, C2)
    b3m = b3.reshape(STATES_NUM, 1).astype(jnp.float32)

    out_t = pl.pallas_call(
        _make_kernel(n),
        out_shape=jax.ShapeDtypeStruct((STATES_NUM, n), jnp.float32),
        scratch_shapes=[pltpu.VMEM((C2, n), jnp.float32)],
    )(pt, w1m, b1m, w2m, b2m, w3m, b3m)
    return out_t.T                                                       # (n, S)


def reference_forward(x, w1, b1, w2, b2, w3, b3):
    """Pure-JAX reference matching the PyTorch forward pass exactly."""
    dn = ("NCHW", "OIHW", "NCHW")
    y = jax.lax.conv_general_dilated(x, w1, (1, 1), "VALID", dimension_numbers=dn)
    y = y + b1[None, :, None, None]
    y = jax.nn.relu(y)
    y = jax.lax.conv_general_dilated(y, w2, (1, 1), "VALID", dimension_numbers=dn)
    y = y + b2[None, :, None, None]
    y = y.reshape(x.shape[0], -1)          # flatten(start_dim=1)
    y = jax.nn.relu(y)
    return y @ w3.T + b3[None, :]


if __name__ == "__main__":
    key = jax.random.PRNGKey(0)
    kx, k1, k2, k3, k4, k5, k6 = jax.random.split(key, 7)

    # deterministic synthetic parameters (PyTorch layouts / shapes)
    x = jax.random.normal(kx, (BATCH, 1, HEIGHT, WIDTH), jnp.float32)
    w1 = jax.random.normal(k1, (C1, 1, K1, K1), jnp.float32) * 0.10   # conv1.weight
    b1 = jax.random.normal(k2, (C1,), jnp.float32) * 0.10             # conv1.bias
    w2 = jax.random.normal(k3, (C2, C1, K2, K2), jnp.float32) * 0.02  # conv2.weight
    b2 = jax.random.normal(k4, (C2,), jnp.float32) * 0.10             # conv2.bias
    w3 = jax.random.normal(k5, (STATES_NUM, C2), jnp.float32) * 0.10  # fc1.weight
    b3 = jax.random.normal(k6, (STATES_NUM,), jnp.float32) * 0.10     # fc1.bias

    out = agentnet_forward(x, w1, b1, w2, b2, w3, b3)
    out = jax.block_until_ready(out)

    ref = reference_forward(x, w1, b1, w2, b2, w3, b3)
    if not bool(jnp.allclose(out, ref, rtol=2e-3, atol=2e-3)):
        raise AssertionError(
            f"Pallas output mismatch, max abs err = {float(jnp.max(jnp.abs(out - ref)))}")
    print("KERNEL_OK")
</pallas_src>

<mosaic_0001>
module attributes {stable_mosaic.version = 11 : i64} {
  func.func @kernel(%arg0: memref<16x512xf32, #tpu.memory_space<vmem>>, %arg1: memref<32x16xf32, #tpu.memory_space<vmem>>, %arg2: memref<32x1xf32, #tpu.memory_space<vmem>>, %arg3: memref<32x32x256xf32, #tpu.memory_space<vmem>>, %arg4: memref<32x1xf32, #tpu.memory_space<vmem>>, %arg5: memref<8x32xf32, #tpu.memory_space<vmem>>, %arg6: memref<8x1xf32, #tpu.memory_space<vmem>>, %arg7: memref<8x2xf32, #tpu.memory_space<vmem>>, %arg8: memref<32x2xf32, #tpu.memory_space<vmem>>) attributes {dimension_semantics = [], scalar_prefetch = 0 : i64, scratch_operands = 1 : i64, tpu.core_type = #tpu.core_type<tc>} {
    %c0 = arith.constant 0 : index
    %c0_0 = arith.constant 0 : index
    %0 = vector.load %arg1[%c0, %c0_0] : memref<32x16xf32, #tpu.memory_space<vmem>>, vector<32x16xf32>
    %c0_1 = arith.constant 0 : index
    %c0_2 = arith.constant 0 : index
    %1 = vector.load %arg0[%c0_1, %c0_2] : memref<16x512xf32, #tpu.memory_space<vmem>>, vector<16x512xf32>
    %cst = arith.constant dense<0.000000e+00> : vector<32x512xf32>
    %2 = tpu.matmul %0, %1, %cst {dimension_numbers = #tpu.dot_dimension_numbers<[1], [0], [0], [1], [0, 0, 1, 1], [], []>} : vector<32x16xf32>, vector<16x512xf32>, vector<32x512xf32> -> vector<32x512xf32>
    %c0_3 = arith.constant 0 : index
    %c0_4 = arith.constant 0 : index
    %3 = vector.load %arg2[%c0_3, %c0_4] : memref<32x1xf32, #tpu.memory_space<vmem>>, vector<32x1xf32>
    %4 = vector.broadcast %3 : vector<32x1xf32> to vector<32x512xf32>
    %5 = arith.addf %2, %4 : vector<32x512xf32>
    %cst_5 = arith.constant 0.000000e+00 : f32
    %6 = vector.broadcast %cst_5 : f32 to vector<32x512xf32>
    %7 = arith.maximumf %5, %6 : vector<32x512xf32>
    %c0_6 = arith.constant 0 : index
    %c0_7 = arith.constant 0 : index
    %c0_8 = arith.constant 0 : index
    %8 = vector.load %arg3[%c0_6, %c0_7, %c0_8] : memref<32x32x256xf32, #tpu.memory_space<vmem>>, vector<32x32x256xf32>
    %9 = vector.extract_strided_slice %7 {offsets = [0, 0], sizes = [32, 256], strides = [1, 1]} : vector<32x512xf32> to vector<32x256xf32>
    %10 = vector.shape_cast %9 : vector<32x256xf32> to vector<1x32x256xf32>
    %11 = vector.broadcast %10 : vector<1x32x256xf32> to vector<32x32x256xf32>
    %12 = arith.mulf %8, %11 : vector<32x32x256xf32>
    %cst_9 = arith.constant dense<0.000000e+00> : vector<32x32xf32>
    %13 = vector.multi_reduction <add>, %12, %cst_9 [2] : vector<32x32x256xf32> to vector<32x32xf32>
    %cst_10 = arith.constant dense<0.000000e+00> : vector<32xf32>
    %14 = vector.multi_reduction <add>, %13, %cst_10 [1] : vector<32x32xf32> to vector<32xf32>
    %15 = vector.shape_cast %14 : vector<32xf32> to vector<32x1xf32>
    %c0_11 = arith.constant 0 : index
    %c0_12 = arith.constant 0 : index
    %16 = vector.load %arg8[%c0_11, %c0_12] : memref<32x2xf32, #tpu.memory_space<vmem>>, vector<32x1xf32>
    tpu.vector_store %arg8[%c0_11, %c0_12], %15 {strides = array<i32>} : memref<32x2xf32, #tpu.memory_space<vmem>>, vector<32x1xf32>,
    %17 = vector.extract_strided_slice %7 {offsets = [0, 256], sizes = [32, 256], strides = [1, 1]} : vector<32x512xf32> to vector<32x256xf32>
    %18 = vector.shape_cast %17 : vector<32x256xf32> to vector<1x32x256xf32>
    %19 = vector.broadcast %18 : vector<1x32x256xf32> to vector<32x32x256xf32>
    %20 = arith.mulf %8, %19 : vector<32x32x256xf32>
    %cst_13 = arith.constant dense<0.000000e+00> : vector<32x32xf32>
    %21 = vector.multi_reduction <add>, %20, %cst_13 [2] : vector<32x32x256xf32> to vector<32x32xf32>
    %cst_14 = arith.constant dense<0.000000e+00> : vector<32xf32>
    %22 = vector.multi_reduction <add>, %21, %cst_14 [1] : vector<32x32xf32> to vector<32xf32>
    %23 = vector.shape_cast %22 : vector<32xf32> to vector<32x1xf32>
    %c0_15 = arith.constant 0 : index
    %c1 = arith.constant 1 : index
    %24 = vector.load %arg8[%c0_15, %c1] : memref<32x2xf32, #tpu.memory_space<vmem>>, vector<32x1xf32>
    tpu.vector_store %arg8[%c0_15, %c1], %23 {strides = array<i32>} : memref<32x2xf32, #tpu.memory_space<vmem>>, vector<32x1xf32>,
    %c0_16 = arith.constant 0 : index
    %c0_17 = arith.constant 0 : index
    %25 = vector.load %arg8[%c0_16, %c0_17] : memref<32x2xf32, #tpu.memory_space<vmem>>, vector<32x2xf32>
    %c0_18 = arith.constant 0 : index
    %c0_19 = arith.constant 0 : index
    %26 = vector.load %arg4[%c0_18, %c0_19] : memref<32x1xf32, #tpu.memory_space<vmem>>, vector<32x1xf32>
    %27 = vector.broadcast %26 : vector<32x1xf32> to vector<32x2xf32>
    %28 = arith.addf %25, %27 : vector<32x2xf32>
    %cst_20 = arith.constant 0.000000e+00 : f32
    %29 = vector.broadcast %cst_20 : f32 to vector<32x2xf32>
    %30 = arith.maximumf %28, %29 : vector<32x2xf32>
    %c0_21 = arith.constant 0 : index
    %c0_22 = arith.constant 0 : index
    %31 = vector.load %arg5[%c0_21, %c0_22] : memref<8x32xf32, #tpu.memory_space<vmem>>, vector<8x32xf32>
    %cst_23 = arith.constant dense<0.000000e+00> : vector<8x2xf32>
    %32 = tpu.matmul %31, %30, %cst_23 {dimension_numbers = #tpu.dot_dimension_numbers<[1], [0], [0], [1], [0, 0, 1, 1], [], []>} : vector<8x32xf32>, vector<32x2xf32>, vector<8x2xf32> -> vector<8x2xf32>
    %c0_24 = arith.constant 0 : index
    %c0_25 = arith.constant 0 : index
    %33 = vector.load %arg6[%c0_24, %c0_25] : memref<8x1xf32, #tpu.memory_space<vmem>>, vector<8x1xf32>
    %34 = vector.broadcast %33 : vector<8x1xf32> to vector<8x2xf32>
    %35 = arith.addf %32, %34 : vector<8x2xf32>
    %c0_26 = arith.constant 0 : index
    %c0_27 = arith.constant 0 : index
    %36 = vector.load %arg7[%c0_26, %c0_27] : memref<8x2xf32, #tpu.memory_space<vmem>>, vector<8x2xf32>
    tpu.vector_store %arg7[%c0_26, %c0_27], %35 {strides = array<i32>} : memref<8x2xf32, #tpu.memory_space<vmem>>, vector<8x2xf32>,
    return
  }
}

</mosaic_0001>

<llo_original>
// kernel: agentnet_forward.1
$region0: #{agentnet_forward.1}
  #allocation0 [shape = 'u32[]', space=smem, size = 0x4, offset = 0x4, fixed_abs, tag = 'smem constant byte address 0x4 - core index']
  #allocation1 [shape = 'u32[144,128]{1,0:T(1,128)}', space=vmem, size = 0x12000, scoped, tag = 'internal scratch']
  #allocation2 [shape = 'f32[32,2]{1,0:T(8,128)}', space=vmem, size = 0x4000, scoped, tag = 'scratch operand']
  %s0 = inlined_call_operand.vmem [shape: f32[16,512], index: 0, kind: input, shape index: {}]
  %s1 = inlined_call_operand.vmem [shape: f32[32,16], index: 1, kind: input, shape index: {}]
  %s2 = inlined_call_operand.vmem [shape: f32[32,1], index: 2, kind: input, shape index: {}]
  %s3 = inlined_call_operand.vmem [shape: f32[32,32,256], index: 3, kind: input, shape index: {}]
  %s4 = inlined_call_operand.vmem [shape: f32[32,1], index: 4, kind: input, shape index: {}]
  %s5 = inlined_call_operand.vmem [shape: f32[8,32], index: 5, kind: input, shape index: {}]
  %s6 = inlined_call_operand.vmem [shape: f32[8,1], index: 6, kind: input, shape index: {}]
  %s7 = inlined_call_operand.vmem [shape: f32[8,2], index: 7, kind: output, shape index: {}]
  %s8 = sld [smem:[#allocation0]]
  $region38: #{agentnet_forward.1} parent=0
    _
  %s10 = ssub.s32 1, %s8
  %s11 = scalar_select 0, %s10, %s8
  // Predicated region
  $region2: #{agentnet_forward.1} parent=0 // pred_check
    _
  $region3: #{agentnet_forward.1} parent=0 // pred_check_branch
    %13 = sbr.rel (0) target = $region5
  $region4: #{agentnet_forward.1} parent=0 // pred_region
    _
  $region5: #{agentnet_forward.1} parent=0 // pred_fallthru
    _
  // Predicated region
  $region6: #{agentnet_forward.1} parent=0 // pred_check
    _
  $region7: #{agentnet_forward.1} parent=0 // pred_check_branch
    %15 = sbr.rel (0) target = $region9
  $region8: #{agentnet_forward.1} parent=0 // pred_region
    _
  $region9: #{agentnet_forward.1} parent=0 // pred_fallthru
    _
  // Predicated region
  $region10: #{agentnet_forward.1} parent=0 // pred_check
    _
  $region11: #{agentnet_forward.1} parent=0 // pred_check_branch
    %17 = sbr.rel (0) target = $region13
  $region12: #{agentnet_forward.1} parent=0 // pred_region
    _
  $region13: #{agentnet_forward.1} parent=0 // pred_fallthru
    _
  // Predicated region
  $region14: #{agentnet_forward.1} parent=0 // pred_check
    _
  $region15: #{agentnet_forward.1} parent=0 // pred_check_branch
    %19 = sbr.rel (0) target = $region17
  $region16: #{agentnet_forward.1} parent=0 // pred_region
    _
  $region17: #{agentnet_forward.1} parent=0 // pred_fallthru
    _
  // Predicated region
  $region18: #{agentnet_forward.1} parent=0 // pred_check
    _
  $region19: #{agentnet_forward.1} parent=0 // pred_check_branch
    %21 = sbr.rel (0) target = $region21
  $region20: #{agentnet_forward.1} parent=0 // pred_region
    _
  $region21: #{agentnet_forward.1} parent=0 // pred_fallthru
    _
  // Predicated region
  $region22: #{agentnet_forward.1} parent=0 // pred_check
    _
  $region23: #{agentnet_forward.1} parent=0 // pred_check_branch
    %23 = sbr.rel (0) target = $region25
  $region24: #{agentnet_forward.1} parent=0 // pred_region
    _
  $region25: #{agentnet_forward.1} parent=0 // pred_fallthru
    _
  // Predicated region
  $region26: #{agentnet_forward.1} parent=0 // pred_check
    _
  $region27: #{agentnet_forward.1} parent=0 // pred_check_branch
    %25 = sbr.rel (0) target = $region29
  $region28: #{agentnet_forward.1} parent=0 // pred_region
    _
  $region29: #{agentnet_forward.1} parent=0 // pred_fallthru
    _
  %v26 = vld [vmem:[%s1] sm:$0xff]
  %v27 = vld [vmem:[%s1 + $0x8] sm:$0xff]
  %v28 = vld [vmem:[%s1 + $0x10] sm:$0xff]
  %v29 = vld [vmem:[%s1 + $0x18] sm:$0xff]
  %v30 = vld [vmem:[%s0] sm:$0xff]
  %v31 = vld [vmem:[%s0 + $0x8] sm:$0xff]
  %v32 = vld [vmem:[%s0 + $0x10] sm:$0xff]
  %v33 = vld [vmem:[%s0 + $0x18] sm:$0xff]
  %v34 = vld [vmem:[%s0 + $0x20] sm:$0xff]
  %v35 = vld [vmem:[%s0 + $0x28] sm:$0xff]
  %v36 = vld [vmem:[%s0 + $0x30] sm:$0xff]
  %v37 = vld [vmem:[%s0 + $0x38] sm:$0xff]
  %v38 = vld [vmem:[%s2] sm:$0xff]
  %v39 = vld [vmem:[%s2 + $0x8] sm:$0xff]
  %v40 = vld [vmem:[%s2 + $0x10] sm:$0xff]
  %v41 = vld [vmem:[%s2 + $0x18] sm:$0xff]
  %43 = vset.pattern.permute.xlu0 0
  %44 = vperm.xlu0 %43, %v38
  %v45 = vpop.permute.xlu0 %44
  %48 = vset.pattern.permute.xlu0 0
  %49 = vperm.xlu0 %48, %v39
  %v50 = vpop.permute.xlu0 %49
  %53 = vset.pattern.permute.xlu0 0
  %54 = vperm.xlu0 %53, %v40
  %v55 = vpop.permute.xlu0 %54
  %58 = vset.pattern.permute.xlu0 0
  %59 = vperm.xlu0 %58, %v41
  %v60 = vpop.permute.xlu0 %59
  %vm62 = vcmask 130048
  %v64 = vsel %vm62, %v26, 0
  %v67 = vsel %vm62, %v27, 0
  %v70 = vsel %vm62, %v28, 0
  %v73 = vsel %vm62, %v29, 0
  %75 = vmatprep.subr.mxu0 %v31
  %76 = vmatpush1.msra.mxu0 %v30
  %77 = vmatprep.subr.mxu0 %v35
  %78 = vmatpush1.msra.mxu0 %v34
  %79 = vmatprep.subr.mxu0 0.0
  %80 = vmatpush1.msra.mxu0 0.0
  %81 = vmatprep.subr.mxu0 0.0
  %82 = vmatpush1.msra.mxu0 0.0
  %83 = vmatprep.subr.mxu0 0.0
  %84 = vmatpush1.msra.mxu0 0.0
  %85 = vmatprep.subr.mxu0 0.0
  %86 = vmatpush1.msra.mxu0 0.0
  %87 = vmatprep.subr.mxu0 0.0
  %88 = vmatpush1.msra.mxu0 0.0
  %89 = vmatprep.subr.mxu0 0.0
  %90 = vmatpush1.msra.mxu0 0.0
  %91 = vmatprep.subr.mxu0 0.0
  %92 = vmatpush1.msra.mxu0 0.0
  %93 = vmatprep.subr.mxu0 0.0
  %94 = vmatpush1.msra.mxu0 0.0
  %95 = vmatprep.subr.mxu0 0.0
  %96 = vmatpush1.msra.mxu0 0.0
  %97 = vmatprep.subr.mxu0 0.0
  %98 = vmatpush1.msra.mxu0 0.0
  %99 = vmatprep.subr.mxu0 0.0
  %100 = vmatpush1.msra.mxu0 0.0
  %101 = vmatprep.subr.mxu0 0.0
  %102 = vmatpush1.msra.mxu0 0.0
  %103 = vmatprep.subr.mxu0 0.0
  %104 = vmatpush1.msra.mxu0 0.0
  %105 = vmatprep.subr.mxu0 0.0
  %106 = vmatpush1.msra.mxu0 0.0
  %107 = vmatprep.subr.mxu0 0.0
  %108 = vmatpush1.msra.mxu0 0.0
  %109 = vmatprep.subr.mxu0 0.0
  %110 = vmatpush1.msra.mxu0 0.0
  %111 = vmatprep.subr.mxu0 0.0
  %112 = vmatpush1.msra.mxu0 0.0
  %113 = vmatprep.subr.mxu0 0.0
  %114 = vmatpush1.msra.mxu0 0.0
  %115 = vmatprep.subr.mxu0 0.0
  %116 = vmatpush1.msra.mxu0 0.0
  %117 = vmatprep.subr.mxu0 0.0
  %118 = vmatpush1.msra.mxu0 0.0
  %119 = vmatprep.subr.mxu0 0.0
  %120 = vmatpush1.msra.mxu0 0.0
  %121 = vmatprep.subr.mxu0 0.0
  %122 = vmatpush1.msra.mxu0 0.0
  %123 = vmatprep.subr.mxu0 0.0
  %124 = vmatpush1.msra.mxu0 0.0
  %125 = vmatprep.subr.mxu0 0.0
  %126 = vmatpush1.msra.mxu0 0.0
  %127 = vmatprep.subr.mxu0 0.0
  %128 = vmatpush1.msra.mxu0 0.0
  %129 = vmatprep.subr.mxu0 0.0
  %130 = vmatpush1.msra.mxu0 0.0
  %131 = vmatprep.subr.mxu0 0.0
  %132 = vmatpush1.msra.mxu0 0.0
  %133 = vmatprep.subr.mxu0 0.0
  %134 = vmatpush1.msra.mxu0 0.0
  %135 = vmatprep.subr.mxu0 0.0
  %136 = vmatpush1.msra.mxu0 0.0
  %137 = vmatprep.subr.mxu0 0.0
  %138 = vmatpush1.msra.mxu0 0.0
  %139 = vmatprep.mubr.f32.mxu0 0.0
  %140 = vmatmul.mubr.f32.gmra.mrb[0].mxu0 %v64
  %v141 = vpop.f32.mrb[0].mxu0
  %v142 = vadd.f32 %v45, %v141
  %v143 = vpop.f32.mrb[0].mxu0
  %v144 = vadd.f32 %v45, %v143
  %145 = vmatprep.mubr.f32.mxu0 0.0
  %146 = vmatmul.mubr.f32.gmra.mrb[0].mxu0 %v67
  %v147 = vpop.f32.mrb[0].mxu0
  %v148 = vadd.f32 %v50, %v147
  %v149 = vpop.f32.mrb[0].mxu0
  %v150 = vadd.f32 %v50, %v149
  %151 = vmatprep.mubr.f32.mxu0 0.0
  %152 = vmatmul.mubr.f32.gmra.mrb[0].mxu0 %v70
  %v153 = vpop.f32.mrb[0].mxu0
  %v154 = vadd.f32 %v55, %v153
  %v155 = vpop.f32.mrb[0].mxu0
  %v156 = vadd.f32 %v55, %v155
  %157 = vmatprep.mubr.f32.mxu0 0.0
  %158 = vmatmul.mubr.f32.gmra.mrb[0].mxu0 %v73
  %v159 = vpop.f32.mrb[0].mxu0
  %v160 = vadd.f32 %v60, %v159
  %v161 = vpop.f32.mrb[0].mxu0
  %v162 = vadd.f32 %v60, %v161
  %163 = vdwg.mxu0
  %164 = vmatprep.subr.mxu0 %v33
  %165 = vmatpush1.msra.mxu0 %v32
  %166 = vmatprep.subr.mxu0 %v37
  %167 = vmatpush1.msra.mxu0 %v36
  %168 = vmatprep.subr.mxu0 0.0
  %169 = vmatpush1.msra.mxu0 0.0
  %170 = vmatprep.subr.mxu0 0.0
  %171 = vmatpush1.msra.mxu0 0.0
  %172 = vmatprep.subr.mxu0 0.0
  %173 = vmatpush1.msra.mxu0 0.0
  %174 = vmatprep.subr.mxu0 0.0
  %175 = vmatpush1.msra.mxu0 0.0
  %176 = vmatprep.subr.mxu0 0.0
  %177 = vmatpush1.msra.mxu0 0.0
  %178 = vmatprep.subr.mxu0 0.0
  %179 = vmatpush1.msra.mxu0 0.0
  %180 = vmatprep.subr.mxu0 0.0
  %181 = vmatpush1.msra.mxu0 0.0
  %182 = vmatprep.subr.mxu0 0.0
  %183 = vmatpush1.msra.mxu0 0.0
  %184 = vmatprep.subr.mxu0 0.0
  %185 = vmatpush1.msra.mxu0 0.0
  %186 = vmatprep.subr.mxu0 0.0
  %187 = vmatpush1.msra.mxu0 0.0
  %188 = vmatprep.subr.mxu0 0.0
  %189 = vmatpush1.msra.mxu0 0.0
  %190 = vmatprep.subr.mxu0 0.0
  %191 = vmatpush1.msra.mxu0 0.0
  %192 = vmatprep.subr.mxu0 0.0
  %193 = vmatpush1.msra.mxu0 0.0
  %194 = vmatprep.subr.mxu0 0.0
  %195 = vmatpush1.msra.mxu0 0.0
  %196 = vmatprep.subr.mxu0 0.0
  %197 = vmatpush1.msra.mxu0 0.0
  %198 = vmatprep.subr.mxu0 0.0
  %199 = vmatpush1.msra.mxu0 0.0
  %200 = vmatprep.subr.mxu0 0.0
  %201 = vmatpush1.msra.mxu0 0.0
  %202 = vmatprep.subr.mxu0 0.0
  %203 = vmatpush1.msra.mxu0 0.0
  %204 = vmatprep.subr.mxu0 0.0
  %205 = vmatpush1.msra.mxu0 0.0
  %206 = vmatprep.subr.mxu0 0.0
  %207 = vmatpush1.msra.mxu0 0.0
  %208 = vmatprep.subr.mxu0 0.0
  %209 = vmatpush1.msra.mxu0 0.0
  %210 = vmatprep.subr.mxu0 0.0
  %211 = vmatpush1.msra.mxu0 0.0
  %212 = vmatprep.subr.mxu0 0.0
  %213 = vmatpush1.msra.mxu0 0.0
  %214 = vmatprep.subr.mxu0 0.0
  %215 = vmatpush1.msra.mxu0 0.0
  %216 = vmatprep.subr.mxu0 0.0
  %217 = vmatpush1.msra.mxu0 0.0
  %218 = vmatprep.subr.mxu0 0.0
  %219 = vmatpush1.msra.mxu0 0.0
  %220 = vmatprep.subr.mxu0 0.0
  %221 = vmatpush1.msra.mxu0 0.0
  %222 = vmatprep.subr.mxu0 0.0
  %223 = vmatpush1.msra.mxu0 0.0
  %224 = vmatprep.subr.mxu0 0.0
  %225 = vmatpush1.msra.mxu0 0.0
  %226 = vmatprep.subr.mxu0 0.0
  %227 = vmatpush1.msra.mxu0 0.0
  %228 = vmatprep.mubr.f32.mxu0 0.0
  %229 = vmatmul.mubr.f32.gmra.mrb[0].mxu0 %v64
  %v230 = vpop.f32.mrb[0].mxu0
  %v231 = vadd.f32 %v45, %v230
  %v232 = vpop.f32.mrb[0].mxu0
  %v233 = vadd.f32 %v45, %v232
  %234 = vmatprep.mubr.f32.mxu0 0.0
  %235 = vmatmul.mubr.f32.gmra.mrb[0].mxu0 %v67
  %v236 = vpop.f32.mrb[0].mxu0
  %v237 = vadd.f32 %v50, %v236
  %v238 = vpop.f32.mrb[0].mxu0
  %v239 = vadd.f32 %v50, %v238
  %240 = vmatprep.mubr.f32.mxu0 0.0
  %241 = vmatmul.mubr.f32.gmra.mrb[0].mxu0 %v70
  %v242 = vpop.f32.mrb[0].mxu0
  %v243 = vadd.f32 %v55, %v242
  %v244 = vpop.f32.mrb[0].mxu0
  %v245 = vadd.f32 %v55, %v244
  %246 = vmatprep.mubr.f32.mxu0 0.0
  %247 = vmatmul.mubr.f32.gmra.mrb[0].mxu0 %v73
  %v248 = vpop.f32.mrb[0].mxu0
  %v249 = vadd.f32 %v60, %v248
  %v250 = vpop.f32.mrb[0].mxu0
  %v251 = vadd.f32 %v60, %v250
  %252 = vdwg.mxu0
  %v253 = vmax.f32 %v142, 0.0
  %v254 = vmax.f32 %v144, 0.0
  %v255 = vmax.f32 %v231, 0.0
  %v256 = vmax.f32 %v233, 0.0
  %v257 = vmax.f32 %v148, 0.0
  %v258 = vmax.f32 %v150, 0.0
  %v259 = vmax.f32 %v237, 0.0
  %v260 = vmax.f32 %v239, 0.0
  %v261 = vmax.f32 %v154, 0.0
  %v262 = vmax.f32 %v156, 0.0
  %v263 = vmax.f32 %v243, 0.0
  %v264 = vmax.f32 %v245, 0.0
  %v265 = vmax.f32 %v160, 0.0
  %v266 = vmax.f32 %v162, 0.0
  %v267 = vmax.f32 %v249, 0.0
  %v268 = vmax.f32 %v251, 0.0
  %v269 = vld [vmem:[%s3] sm:$0xff]
  %v270 = vld [vmem:[%s3 + $0x8] sm:$0xff]
  %v271 = vld [vmem:[%s3 + $0x10] sm:$0xff]
  %v272 = vld [vmem:[%s3 + $0x18] sm:$0xff]
  %v273 = vld [vmem:[%s3 + $0x20] sm:$0xff]
  %v274 = vld [vmem:[%s3 + $0x28] sm:$0xff]
  %v275 = vld [vmem:[%s3 + $0x30] sm:$0xff]
  %v276 = vld [vmem:[%s3 + $0x38] sm:$0xff]
  %v277 = vld [vmem:[%s3 + $0x40] sm:$0xff]
  %v278 = vld [vmem:[%s3 + $0x48] sm:$0xff]
  %v279 = vld [vmem:[%s3 + $0x50] sm:$0xff]
  %v280 = vld [vmem:[%s3 + $0x58] sm:$0xff]
  %v281 = vld [vmem:[%s3 + $0x60] sm:$0xff]
  %v282 = vld [vmem:[%s3 + $0x68] sm:$0xff]
  %v283 = vld [vmem:[%s3 + $0x70] sm:$0xff]
  %v284 = vld [vmem:[%s3 + $0x78] sm:$0xff]
  %v285 = vld [vmem:[%s3 + $0x80] sm:$0xff]
  %v286 = vld [vmem:[%s3 + $0x88] sm:$0xff]
  %v287 = vld [vmem:[%s3 + $0x90] sm:$0xff]
  %v288 = vld [vmem:[%s3 + $0x98] sm:$0xff]
  %v289 = vld [vmem:[%s3 + $0xa0] sm:$0xff]
  %v290 = vld [vmem:[%s3 + $0xa8] sm:$0xff]
  %v291 = vld [vmem:[%s3 + $0xb0] sm:$0xff]
  %v292 = vld [vmem:[%s3 + $0xb8] sm:$0xff]
  %v293 = vld [vmem:[%s3 + $0xc0] sm:$0xff]
  %v294 = vld [vmem:[%s3 + $0xc8] sm:$0xff]
  %v295 = vld [vmem:[%s3 + $0xd0] sm:$0xff]
  %v296 = vld [vmem:[%s3 + $0xd8] sm:$0xff]
  %v297 = vld [vmem:[%s3 + $0xe0] sm:$0xff]
  %v298 = vld [vmem:[%s3 + $0xe8] sm:$0xff]
  %v299 = vld [vmem:[%s3 + $0xf0] sm:$0xff]
  %v300 = vld [vmem:[%s3 + $0xf8] sm:$0xff]
  %v301 = vld [vmem:[%s3 + $0x100] sm:$0xff]
  %v302 = vld [vmem:[%s3 + $0x108] sm:$0xff]
  %v303 = vld [vmem:[%s3 + $0x110] sm:$0xff]
  %v304 = vld [vmem:[%s3 + $0x118] sm:$0xff]
  %v305 = vld [vmem:[%s3 + $0x120] sm:$0xff]
  %v306 = vld [vmem:[%s3 + $0x128] sm:$0xff]
  %v307 = vld [vmem:[%s3 + $0x130] sm:$0xff]
  %v308 = vld [vmem:[%s3 + $0x138] sm:$0xff]
  %v309 = vld [vmem:[%s3 + $0x140] sm:$0xff]
  %v310 = vld [vmem:[%s3 + $0x148] sm:$0xff]
  %v311 = vld [vmem:[%s3 + $0x150] sm:$0xff]
  %v312 = vld [vmem:[%s3 + $0x158] sm:$0xff]
  %v313 = vld [vmem:[%s3 + $0x160] sm:$0xff]
  %v314 = vld [vmem:[%s3 + $0x168] sm:$0xff]
  %v315 = vld [vmem:[%s3 + $0x170] sm:$0xff]
  %v316 = vld [vmem:[%s3 + $0x178] sm:$0xff]
  %v317 = vld [vmem:[%s3 + $0x180] sm:$0xff]
  %v318 = vld [vmem:[%s3 + $0x188] sm:$0xff]
  %v319 = vld [vmem:[%s3 + $0x190] sm:$0xff]
  %v320 = vld [vmem:[%s3 + $0x198] sm:$0xff]
  %v321 = vld [vmem:[%s3 + $0x1a0] sm:$0xff]
  %v322 = vld [vmem:[%s3 + $0x1a8] sm:$0xff]
  %v323 = vld [vmem:[%s3 + $0x1b0] sm:$0xff]
  %v324 = vld [vmem:[%s3 + $0x1b8] sm:$0xff]
  %v325 = vld [vmem:[%s3 + $0x1c0] sm:$0xff]
  %v326 = vld [vmem:[%s3 + $0x1c8] sm:$0xff]
  %v327 = vld [vmem:[%s3 + $0x1d0] sm:$0xff]
  %v328 = vld [vmem:[%s3 + $0x1d8] sm:$0xff]
  %v329 = vld [vmem:[%s3 + $0x1e0] sm:$0xff]
  %v330 = vld [vmem:[%s3 + $0x1e8] sm:$0xff]
  %v331 = vld [vmem:[%s3 + $0x1f0] sm:$0xff]
  %v332 = vld [vmem:[%s3 + $0x1f8] sm:$0xff]
  %v333 = vld [vmem:[%s3 + $0x200] sm:$0xff]
  %v334 = vld [vmem:[%s3 + $0x208] sm:$0xff]
  %v335 = vld [vmem:[%s3 + $0x210] sm:$0xff]
  %v336 = vld [vmem:[%s3 + $0x218] sm:$0xff]
  %v337 = vld [vmem:[%s3 + $0x220] sm:$0xff]
  %v338 = vld [vmem:[%s3 + $0x228] sm:$0xff]
  %v339 = vld [vmem:[%s3 + $0x230] sm:$0xff]
  %v340 = vld [vmem:[%s3 + $0x238] sm:$0xff]
  %v341 = vld [vmem:[%s3 + $0x240] sm:$0xff]
  %v342 = vld [vmem:[%s3 + $0x248] sm:$0xff]
  %v343 = vld [vmem:[%s3 + $0x250] sm:$0xff]
  %v344 = vld [vmem:[%s3 + $0x258] sm:$0xff]
  %v345 = vld [vmem:[%s3 + $0x260] sm:$0xff]
  %v346 = vld [vmem:[%s3 + $0x268] sm:$0xff]
  %v347 = vld [vmem:[%s3 + $0x270] sm:$0xff]
  %v348 = vld [vmem:[%s3 + $0x278] sm:$0xff]
  %v349 = vld [vmem:[%s3 + $0x280] sm:$0xff]
  %v350 = vld [vmem:[%s3 + $0x288] sm:$0xff]
  %v351 = vld [vmem:[%s3 + $0x290] sm:$0xff]
  %v352 = vld [vmem:[%s3 + $0x298] sm:$0xff]
  %v353 = vld [vmem:[%s3 + $0x2a0] sm:$0xff]
  %v354 = vld [vmem:[%s3 + $0x2a8] sm:$0xff]
  %v355 = vld [vmem:[%s3 + $0x2b0] sm:$0xff]
  %v356 = vld [vmem:[%s3 + $0x2b8] sm:$0xff]
  %v357 = vld [vmem:[%s3 + $0x2c0] sm:$0xff]
  %v358 = vld [vmem:[%s3 + $0x2c8] sm:$0xff]
  %v359 = vld [vmem:[%s3 + $0x2d0] sm:$0xff]
  %v360 = vld [vmem:[%s3 + $0x2d8] sm:$0xff]
  %v361 = vld [vmem:[%s3 + $0x2e0] sm:$0xff]
  %v362 = vld [vmem:[%s3 + $0x2e8] sm:$0xff]
  %v363 = vld [vmem:[%s3 + $0x2f0] sm:$0xff]
  %v364 = vld [vmem:[%s3 + $0x2f8] sm:$0xff]
  %v365 = vld [vmem:[%s3 + $0x300] sm:$0xff]
  %v366 = vld [vmem:[%s3 + $0x308] sm:$0xff]
  %v367 = vld [vmem:[%s3 + $0x310] sm:$0xff]
  %v368 = vld [vmem:[%s3 + $0x318] sm:$0xff]
  %v369 = vld [vmem:[%s3 + $0x320] sm:$0xff]
  %v370 = vld [vmem:[%s3 + $0x328] sm:$0xff]
  %v371 = vld [vmem:[%s3 + $0x330] sm:$0xff]
  %v372 = vld [vmem:[%s3 + $0x338] sm:$0xff]
  %v373 = vld [vmem:[%s3 + $0x340] sm:$0xff]
  %v374 = vld [vmem:[%s3 + $0x348] sm:$0xff]
  %v375 = vld [vmem:[%s3 + $0x350] sm:$0xff]
  %v376 = vld [vmem:[%s3 + $0x358] sm:$0xff]
  %v377 = vld [vmem:[%s3 + $0x360] sm:$0xff]
  %v378 = vld [vmem:[%s3 + $0x368] sm:$0xff]
  %v379 = vld [vmem:[%s3 + $0x370] sm:$0xff]
  %v380 = vld [vmem:[%s3 + $0x378] sm:$0xff]
  %v381 = vld [vmem:[%s3 + $0x380] sm:$0xff]
  %v382 = vld [vmem:[%s3 + $0x388] sm:$0xff]
  %v383 = vld [vmem:[%s3 + $0x390] sm:$0xff]
  %v384 = vld [vmem:[%s3 + $0x398] sm:$0xff]
  %v385 = vld [vmem:[%s3 + $0x3a0] sm:$0xff]
  %v386 = vld [vmem:[%s3 + $0x3a8] sm:$0xff]
  %v387 = vld [vmem:[%s3 + $0x3b0] sm:$0xff]
  %v388 = vld [vmem:[%s3 + $0x3b8] sm:$0xff]
  %v389 = vld [vmem:[%s3 + $0x3c0] sm:$0xff]
  %v390 = vld [vmem:[%s3 + $0x3c8] sm:$0xff]
  %v391 = vld [vmem:[%s3 + $0x3d0] sm:$0xff]
  %v392 = vld [vmem:[%s3 + $0x3d8] sm:$0xff]
  %v393 = vld [vmem:[%s3 + $0x3e0] sm:$0xff]
  %v394 = vld [vmem:[%s3 + $0x3e8] sm:$0xff]
  %v395 = vld [vmem:[%s3 + $0x3f0] sm:$0xff]
  %v396 = vld [vmem:[%s3 + $0x3f8] sm:$0xff]
  %v397 = vld [vmem:[%s3 + $0x400] sm:$0xff]
  %v398 = vld [vmem:[%s3 + $0x408] sm:$0xff]
  %v399 = vld [vmem:[%s3 + $0x410] sm:$0xff]
  %v400 = vld [vmem:[%s3 + $0x418] sm:$0xff]
  %v401 = vld [vmem:[%s3 + $0x420] sm:$0xff]
  %v402 = vld [vmem:[%s3 + $0x428] sm:$0xff]
  %v403 = vld [vmem:[%s3 + $0x430] sm:$0xff]
  %v404 = vld [vmem:[%s3 + $0x438] sm:$0xff]
  %v405 = vld [vmem:[%s3 + $0x440] sm:$0xff]
  %v406 = vld [vmem:[%s3 + $0x448] sm:$0xff]
  %v407 = vld [vmem:[%s3 + $0x450] sm:$0xff]
  %v408 = vld [vmem:[%s3 + $0x458] sm:$0xff]
  %v409 = vld [vmem:[%s3 + $0x460] sm:$0xff]
  %v410 = vld [vmem:[%s3 + $0x468] sm:$0xff]
  %v411 = vld [vmem:[%s3 + $0x470] sm:$0xff]
  %v412 = vld [vmem:[%s3 + $0x478] sm:$0xff]
  %v413 = vld [vmem:[%s3 + $0x480] sm:$0xff]
  %v414 = vld [vmem:[%s3 + $0x488] sm:$0xff]
  %v415 = vld [vmem:[%s3 + $0x490] sm:$0xff]
  %v416 = vld [vmem:[%s3 + $0x498] sm:$0xff]
  %v417 = vld [vmem:[%s3 + $0x4a0] sm:$0xff]
  %v418 = vld [vmem:[%s3 + $0x4a8] sm:$0xff]
  %v419 = vld [vmem:[%s3 + $0x4b0] sm:$0xff]
  %v420 = vld [vmem:[%s3 + $0x4b8] sm:$0xff]
  %v421 = vld [vmem:[%s3 + $0x4c0] sm:$0xff]
  %v422 = vld [vmem:[%s3 + $0x4c8] sm:$0xff]
  %v423 = vld [vmem:[%s3 + $0x4d0] sm:$0xff]
  %v424 = vld [vmem:[%s3 + $0x4d8] sm:$0xff]
  %v425 = vld [vmem:[%s3 + $0x4e0] sm:$0xff]
  %v426 = vld [vmem:[%s3 + $0x4e8] sm:$0xff]
  %v427 = vld [vmem:[%s3 + $0x4f0] sm:$0xff]
  %v428 = vld [vmem:[%s3 + $0x4f8] sm:$0xff]
  %v429 = vld [vmem:[%s3 + $0x500] sm:$0xff]
  %v430 = vld [vmem:[%s3 + $0x508] sm:$0xff]
  %v431 = vld [vmem:[%s3 + $0x510] sm:$0xff]
  %v432 = vld [vmem:[%s3 + $0x518] sm:$0xff]
  %v433 = vld [vmem:[%s3 + $0x520] sm:$0xff]
  %v434 = vld [vmem:[%s3 + $0x528] sm:$0xff]
  %v435 = vld [vmem:[%s3 + $0x530] sm:$0xff]
  %v436 = vld [vmem:[%s3 + $0x538] sm:$0xff]
  %v437 = vld [vmem:[%s3 + $0x540] sm:$0xff]
  %v438 = vld [vmem:[%s3 + $0x548] sm:$0xff]
  %v439 = vld [vmem:[%s3 + $0x550] sm:$0xff]
  %v440 = vld [vmem:[%s3 + $0x558] sm:$0xff]
  %v441 = vld [vmem:[%s3 + $0x560] sm:$0xff]
  %v442 = vld [vmem:[%s3 + $0x568] sm:$0xff]
  %v443 = vld [vmem:[%s3 + $0x570] sm:$0xff]
  %v444 = vld [vmem:[%s3 + $0x578] sm:$0xff]
  %v445 = vld [vmem:[%s3 + $0x580] sm:$0xff]
  %v446 = vld [vmem:[%s3 + $0x588] sm:$0xff]
  %v447 = vld [vmem:[%s3 + $0x590] sm:$0xff]
  %v448 = vld [vmem:[%s3 + $0x598] sm:$0xff]
  %v449 = vld [vmem:[%s3 + $0x5a0] sm:$0xff]
  %v450 = vld [vmem:[%s3 + $0x5a8] sm:$0xff]
  %v451 = vld [vmem:[%s3 + $0x5b0] sm:$0xff]
  %v452 = vld [vmem:[%s3 + $0x5b8] sm:$0xff]
  %v453 = vld [vmem:[%s3 + $0x5c0] sm:$0xff]
  %v454 = vld [vmem:[%s3 + $0x5c8] sm:$0xff]
  %v455 = vld [vmem:[%s3 + $0x5d0] sm:$0xff]
  %v456 = vld [vmem:[%s3 + $0x5d8] sm:$0xff]
  %v457 = vld [vmem:[%s3 + $0x5e0] sm:$0xff]
  %v458 = vld [vmem:[%s3 + $0x5e8] sm:$0xff]
  %v459 = vld [vmem:[%s3 + $0x5f0] sm:$0xff]
  %v460 = vld [vmem:[%s3 + $0x5f8] sm:$0xff]
  %v461 = vld [vmem:[%s3 + $0x600] sm:$0xff]
  %v462 = vld [vmem:[%s3 + $0x608] sm:$0xff]
  %v463 = vld [vmem:[%s3 + $0x610] sm:$0xff]
  %v464 = vld [vmem:[%s3 + $0x618] sm:$0xff]
  %v465 = vld [vmem:[%s3 + $0x620] sm:$0xff]
  %v466 = vld [vmem:[%s3 + $0x628] sm:$0xff]
  %v467 = vld [vmem:[%s3 + $0x630] sm:$0xff]
  %v468 = vld [vmem:[%s3 + $0x638] sm:$0xff]
  %v469 = vld [vmem:[%s3 + $0x640] sm:$0xff]
  %v470 = vld [vmem:[%s3 + $0x648] sm:$0xff]
  %v471 = vld [vmem:[%s3 + $0x650] sm:$0xff]
  %v472 = vld [vmem:[%s3 + $0x658] sm:$0xff]
  %v473 = vld [vmem:[%s3 + $0x660] sm:$0xff]
  %v474 = vld [vmem:[%s3 + $0x668] sm:$0xff]
  %v475 = vld [vmem:[%s3 + $0x670] sm:$0xff]
  %v476 = vld [vmem:[%s3 + $0x678] sm:$0xff]
  %v477 = vld [vmem:[%s3 + $0x680] sm:$0xff]
  %v478 = vld [vmem:[%s3 + $0x688] sm:$0xff]
  %v479 = vld [vmem:[%s3 + $0x690] sm:$0xff]
  %v480 = vld [vmem:[%s3 + $0x698] sm:$0xff]
  %v481 = vld [vmem:[%s3 + $0x6a0] sm:$0xff]
  %v482 = vld [vmem:[%s3 + $0x6a8] sm:$0xff]
  %v483 = vld [vmem:[%s3 + $0x6b0] sm:$0xff]
  %v484 = vld [vmem:[%s3 + $0x6b8] sm:$0xff]
  %v485 = vld [vmem:[%s3 + $0x6c0] sm:$0xff]
  %v486 = vld [vmem:[%s3 + $0x6c8] sm:$0xff]
  %v487 = vld [vmem:[%s3 + $0x6d0] sm:$0xff]
  %v488 = vld [vmem:[%s3 + $0x6d8] sm:$0xff]
  %v489 = vld [vmem:[%s3 + $0x6e0] sm:$0xff]
  %v490 = vld [vmem:[%s3 + $0x6e8] sm:$0xff]
  %v491 = vld [vmem:[%s3 + $0x6f0] sm:$0xff]
  %v492 = vld [vmem:[%s3 + $0x6f8] sm:$0xff]
  %v493 = vld [vmem:[%s3 + $0x700] sm:$0xff]
  %v494 = vld [vmem:[%s3 + $0x708] sm:$0xff]
  %v495 = vld [vmem:[%s3 + $0x710] sm:$0xff]
  %v496 = vld [vmem:[%s3 + $0x718] sm:$0xff]
  %v497 = vld [vmem:[%s3 + $0x720] sm:$0xff]
  %v498 = vld [vmem:[%s3 + $0x728] sm:$0xff]
  %v499 = vld [vmem:[%s3 + $0x730] sm:$0xff]
  %v500 = vld [vmem:[%s3 + $0x738] sm:$0xff]
  %v501 = vld [vmem:[%s3 + $0x740] sm:$0xff]
  %v502 = vld [vmem:[%s3 + $0x748] sm:$0xff]
  %v503 = vld [vmem:[%s3 + $0x750] sm:$0xff]
  %v504 = vld [vmem:[%s3 + $0x758] sm:$0xff]
  %v505 = vld [vmem:[%s3 + $0x760] sm:$0xff]
  %v506 = vld [vmem:[%s3 + $0x768] sm:$0xff]
  %v507 = vld [vmem:[%s3 + $0x770] sm:$0xff]
  %v508 = vld [vmem:[%s3 + $0x778] sm:$0xff]
  %v509 = vld [vmem:[%s3 + $0x780] sm:$0xff]
  %v510 = vld [vmem:[%s3 + $0x788] sm:$0xff]
  %v511 = vld [vmem:[%s3 + $0x790] sm:$0xff]
  %v512 = vld [vmem:[%s3 + $0x798] sm:$0xff]
  %v513 = vld [vmem:[%s3 + $0x7a0] sm:$0xff]
  %v514 = vld [vmem:[%s3 + $0x7a8] sm:$0xff]
  %v515 = vld [vmem:[%s3 + $0x7b0] sm:$0xff]
  %v516 = vld [vmem:[%s3 + $0x7b8] sm:$0xff]
  %v517 = vld [vmem:[%s3 + $0x7c0] sm:$0xff]
  %v518 = vld [vmem:[%s3 + $0x7c8] sm:$0xff]
  %v519 = vld [vmem:[%s3 + $0x7d0] sm:$0xff]
  %v520 = vld [vmem:[%s3 + $0x7d8] sm:$0xff]
  %v521 = vld [vmem:[%s3 + $0x7e0] sm:$0xff]
  %v522 = vld [vmem:[%s3 + $0x7e8] sm:$0xff]
  %v523 = vld [vmem:[%s3 + $0x7f0] sm:$0xff]
  %v524 = vld [vmem:[%s3 + $0x7f8] sm:$0xff]
  %v525 = vmul.f32 %v269, %v253
  %v526 = vmul.f32 %v270, %v254
  %v527 = vmul.f32 %v271, %v257
  %v528 = vmul.f32 %v272, %v258
  %v529 = vmul.f32 %v273, %v261
  %v530 = vmul.f32 %v274, %v262
  %v531 = vmul.f32 %v275, %v265
  %v532 = vmul.f32 %v276, %v266
  %v533 = vmul.f32 %v277, %v253
  %v534 = vmul.f32 %v278, %v254
  %v535 = vmul.f32 %v279, %v257
  %v536 = vmul.f32 %v280, %v258
  %v537 = vmul.f32 %v281, %v261
  %v538 = vmul.f32 %v282, %v262
  %v539 = vmul.f32 %v283, %v265
  %v540 = vmul.f32 %v284, %v266
  %v541 = vmul.f32 %v285, %v253
  %v542 = vmul.f32 %v286, %v254
  %v543 = vmul.f32 %v287, %v257
  %v544 = vmul.f32 %v288, %v258
  %v545 = vmul.f32 %v289, %v261
  %v546 = vmul.f32 %v290, %v262
  %v547 = vmul.f32 %v291, %v265
  %v548 = vmul.f32 %v292, %v266
  %v549 = vmul.f32 %v293, %v253
  %v550 = vmul.f32 %v294, %v254
  %v551 = vmul.f32 %v295, %v257
  %v552 = vmul.f32 %v296, %v258
  %v553 = vmul.f32 %v297, %v261
  %v554 = vmul.f32 %v298, %v262
  %v555 = vmul.f32 %v299, %v265
  %v556 = vmul.f32 %v300, %v266
  %v557 = vmul.f32 %v301, %v253
  %v558 = vmul.f32 %v302, %v254
  %v559 = vmul.f32 %v303, %v257
  %v560 = vmul.f32 %v304, %v258
  %v561 = vmul.f32 %v305, %v261
  %v562 = vmul.f32 %v306, %v262
  %v563 = vmul.f32 %v307, %v265
  %v564 = vmul.f32 %v308, %v266
  %v565 = vmul.f32 %v309, %v253
  %v566 = vmul.f32 %v310, %v254
  %v567 = vmul.f32 %v311, %v257
  %v568 = vmul.f32 %v312, %v258
  %v569 = vmul.f32 %v313, %v261
  %v570 = vmul.f32 %v314, %v262
  %v571 = vmul.f32 %v315, %v265
  %v572 = vmul.f32 %v316, %v266
  %v573 = vmul.f32 %v317, %v253
  %v574 = vmul.f32 %v318, %v254
  %v575 = vmul.f32 %v319, %v257
  %v576 = vmul.f32 %v320, %v258
  %v577 = vmul.f32 %v321, %v261
  %v578 = vmul.f32 %v322, %v262
  %v579 = vmul.f32 %v323, %v265
  %v580 = vmul.f32 %v324, %v266
  %v581 = vmul.f32 %v325, %v253
  %v582 = vmul.f32 %v326, %v254
  %v583 = vmul.f32 %v327, %v257
  %v584 = vmul.f32 %v328, %v258
  %v585 = vmul.f32 %v329, %v261
  %v586 = vmul.f32 %v330, %v262
  %v587 = vmul.f32 %v331, %v265
  %v588 = vmul.f32 %v332, %v266
  %v589 = vmul.f32 %v333, %v253
  %v590 = vmul.f32 %v334, %v254
  %v591 = vmul.f32 %v335, %v257
  %v592 = vmul.f32 %v336, %v258
  %v593 = vmul.f32 %v337, %v261
  %v594 = vmul.f32 %v338, %v262
  %v595 = vmul.f32 %v339, %v265
  %v596 = vmul.f32 %v340, %v266
  %v597 = vmul.f32 %v341, %v253
  %v598 = vmul.f32 %v342, %v254
  %v599 = vmul.f32 %v343, %v257
  %v600 = vmul.f32 %v344, %v258
  %v601 = vmul.f32 %v345, %v261
  %v602 = vmul.f32 %v346, %v262
  %v603 = vmul.f32 %v347, %v265
  %v604 = vmul.f32 %v348, %v266
  %v605 = vmul.f32 %v349, %v253
  %v606 = vmul.f32 %v350, %v254
  %v607 = vmul.f32 %v351, %v257
  %v608 = vmul.f32 %v352, %v258
  %v609 = vmul.f32 %v353, %v261
  %v610 = vmul.f32 %v354, %v262
  %v611 = vmul.f32 %v355, %v265
  %v612 = vmul.f32 %v356, %v266
  %v613 = vmul.f32 %v357, %v253
  %v614 = vmul.f32 %v358, %v254
  %v615 = vmul.f32 %v359, %v257
  %v616 = vmul.f32 %v360, %v258
  %v617 = vmul.f32 %v361, %v261
  %v618 = vmul.f32 %v362, %v262
  %v619 = vmul.f32 %v363, %v265
  %v620 = vmul.f32 %v364, %v266
  %v621 = vmul.f32 %v365, %v253
  %v622 = vmul.f32 %v366, %v254
  %v623 = vmul.f32 %v367, %v257
  %v624 = vmul.f32 %v368, %v258
  %v625 = vmul.f32 %v369, %v261
  %v626 = vmul.f32 %v370, %v262
  %v627 = vmul.f32 %v371, %v265
  %v628 = vmul.f32 %v372, %v266
  %v629 = vmul.f32 %v373, %v253
  %v630 = vmul.f32 %v374, %v254
  %v631 = vmul.f32 %v375, %v257
  %v632 = vmul.f32 %v376, %v258
  %v633 = vmul.f32 %v377, %v261
  %v634 = vmul.f32 %v378, %v262
  %v635 = vmul.f32 %v379, %v265
  %v636 = vmul.f32 %v380, %v266
  %v637 = vmul.f32 %v381, %v253
  %v638 = vmul.f32 %v382, %v254
  %v639 = vmul.f32 %v383, %v257
  %v640 = vmul.f32 %v384, %v258
  %v641 = vmul.f32 %v385, %v261
  %v642 = vmul.f32 %v386, %v262
  %v643 = vmul.f32 %v387, %v265
  %v644 = vmul.f32 %v388, %v266
  %v645 = vmul.f32 %v389, %v253
  %v646 = vmul.f32 %v390, %v254
  %v647 = vmul.f32 %v391, %v257
  %v648 = vmul.f32 %v392, %v258
  %v649 = vmul.f32 %v393, %v261
  %v650 = vmul.f32 %v394, %v262
  %v651 = vmul.f32 %v395, %v265
  %v652 = vmul.f32 %v396, %v266
  %v653 = vmul.f32 %v397, %v253
  %v654 = vmul.f32 %v398, %v254
  %v655 = vmul.f32 %v399, %v257
  %v656 = vmul.f32 %v400, %v258
  %v657 = vmul.f32 %v401, %v261
  %v658 = vmul.f32 %v402, %v262
  %v659 = vmul.f32 %v403, %v265
  %v660 = vmul.f32 %v404, %v266
  %v661 = vmul.f32 %v405, %v253
  %v662 = vmul.f32 %v406, %v254
  %v663 = vmul.f32 %v407, %v257
  %v664 = vmul.f32 %v408, %v258
  %v665 = vmul.f32 %v409, %v261
  %v666 = vmul.f32 %v410, %v262
  %v667 = vmul.f32 %v411, %v265
  %v668 = vmul.f32 %v412, %v266
  %v669 = vmul.f32 %v413, %v253
  %v670 = vmul.f32 %v414, %v254
  %v671 = vmul.f32 %v415, %v257
  %v672 = vmul.f32 %v416, %v258
  %v673 = vmul.f32 %v417, %v261
  %v674 = vmul.f32 %v418, %v262
  %v675 = vmul.f32 %v419, %v265
  %v676 = vmul.f32 %v420, %v266
  %v677 = vmul.f32 %v421, %v253
  %v678 = vmul.f32 %v422, %v254
  %v679 = vmul.f32 %v423, %v257
  %v680 = vmul.f32 %v424, %v258
  %v681 = vmul.f32 %v425, %v261
  %v682 = vmul.f32 %v426, %v262
  %v683 = vmul.f32 %v427, %v265
  %v684 = vmul.f32 %v428, %v266
  %v685 = vmul.f32 %v429, %v253
  %v686 = vmul.f32 %v430, %v254
  %v687 = vmul.f32 %v431, %v257
  %v688 = vmul.f32 %v432, %v258
  %v689 = vmul.f32 %v433, %v261
  %v690 = vmul.f32 %v434, %v262
  %v691 = vmul.f32 %v435, %v265
  %v692 = vmul.f32 %v436, %v266
  %v693 = vmul.f32 %v437, %v253
  %v694 = vmul.f32 %v438, %v254
  %v695 = vmul.f32 %v439, %v257
  %v696 = vmul.f32 %v440, %v258
  %v697 = vmul.f32 %v441, %v261
  %v698 = vmul.f32 %v442, %v262
  %v699 = vmul.f32 %v443, %v265
  %v700 = vmul.f32 %v444, %v266
  %v701 = vmul.f32 %v445, %v253
  %v702 = vmul.f32 %v446, %v254
  %v703 = vmul.f32 %v447, %v257
  %v704 = vmul.f32 %v448, %v258
  %v705 = vmul.f32 %v449, %v261
  %v706 = vmul.f32 %v450, %v262
  %v707 = vmul.f32 %v451, %v265
  %v708 = vmul.f32 %v452, %v266
  %v709 = vmul.f32 %v453, %v253
  %v710 = vmul.f32 %v454, %v254
  %v711 = vmul.f32 %v455, %v257
  %v712 = vmul.f32 %v456, %v258
  %v713 = vmul.f32 %v457, %v261
  %v714 = vmul.f32 %v458, %v262
  %v715 = vmul.f32 %v459, %v265
  %v716 = vmul.f32 %v460, %v266
  %v717 = vmul.f32 %v461, %v253
  %v718 = vmul.f32 %v462, %v254
  %v719 = vmul.f32 %v463, %v257
  %v720 = vmul.f32 %v464, %v258
  %v721 = vmul.f32 %v465, %v261
  %v722 = vmul.f32 %v466, %v262
  %v723 = vmul.f32 %v467, %v265
  %v724 = vmul.f32 %v468, %v266
  %v725 = vmul.f32 %v469, %v253
  %v726 = vmul.f32 %v470, %v254
  %v727 = vmul.f32 %v471, %v257
  %v728 = vmul.f32 %v472, %v258
  %v729 = vmul.f32 %v473, %v261
  %v730 = vmul.f32 %v474, %v262
  %v731 = vmul.f32 %v475, %v265
  %v732 = vmul.f32 %v476, %v266
  %v733 = vmul.f32 %v477, %v253
  %v734 = vmul.f32 %v478, %v254
  %v735 = vmul.f32 %v479, %v257
  %v736 = vmul.f32 %v480, %v258
  %v737 = vmul.f32 %v481, %v261
  %v738 = vmul.f32 %v482, %v262
  %v739 = vmul.f32 %v483, %v265
  %v740 = vmul.f32 %v484, %v266
  %v741 = vmul.f32 %v485, %v253
  %v742 = vmul.f32 %v486, %v254
  %v743 = vmul.f32 %v487, %v257
  %v744 = vmul.f32 %v488, %v258
  %v745 = vmul.f32 %v489, %v261
  %v746 = vmul.f32 %v490, %v262
  %v747 = vmul.f32 %v491, %v265
  %v748 = vmul.f32 %v492, %v266
  %v749 = vmul.f32 %v493, %v253
  %v750 = vmul.f32 %v494, %v254
  %v751 = vmul.f32 %v495, %v257
  %v752 = vmul.f32 %v496, %v258
  %v753 = vmul.f32 %v497, %v261
  %v754 = vmul.f32 %v498, %v262
  %v755 = vmul.f32 %v499, %v265
  %v756 = vmul.f32 %v500, %v266
  %v757 = vmul.f32 %v501, %v253
  %v758 = vmul.f32 %v502, %v254
  %v759 = vmul.f32 %v503, %v257
  %v760 = vmul.f32 %v504, %v258
  %v761 = vmul.f32 %v505, %v261
  %v762 = vmul.f32 %v506, %v262
  %v763 = vmul.f32 %v507, %v265
  %v764 = vmul.f32 %v508, %v266
  %v765 = vmul.f32 %v509, %v253
  %v766 = vmul.f32 %v510, %v254
  %v767 = vmul.f32 %v511, %v257
  %v768 = vmul.f32 %v512, %v258
  %v769 = vmul.f32 %v513, %v261
  %v770 = vmul.f32 %v514, %v262
  %v771 = vmul.f32 %v515, %v265
  %v772 = vmul.f32 %v516, %v266
  %v773 = vmul.f32 %v517, %v253
  %v774 = vmul.f32 %v518, %v254
  %v775 = vmul.f32 %v519, %v257
  %v776 = vmul.f32 %v520, %v258
  %v777 = vmul.f32 %v521, %v261
  %v778 = vmul.f32 %v522, %v262
  %v779 = vmul.f32 %v523, %v265
  %v780 = vmul.f32 %v524, %v266
  %v781 = vadd.f32 %v525, %v526
  %782 = vadd.xlane.f32.xlu0 %v781
  %v783 = vpop.xlane.xlu0 %782
  %v784 = vadd.f32 %v527, %v528
  %785 = vadd.xlane.f32.xlu0 %v784
  %v786 = vpop.xlane.xlu0 %785
  %v787 = vadd.f32 %v529, %v530
  %788 = vadd.xlane.f32.xlu0 %v787
  %v789 = vpop.xlane.xlu0 %788
  %v790 = vadd.f32 %v531, %v532
  %791 = vadd.xlane.f32.xlu0 %v790
  %v792 = vpop.xlane.xlu0 %791
  %v793 = vadd.f32 %v533, %v534
  %794 = vadd.xlane.f32.xlu0 %v793
  %v795 = vpop.xlane.xlu0 %794
  %v796 = vadd.f32 %v535, %v536
  %797 = vadd.xlane.f32.xlu0 %v796
  %v798 = vpop.xlane.xlu0 %797
  %v799 = vadd.f32 %v537, %v538
  %800 = vadd.xlane.f32.xlu0 %v799
  %v801 = vpop.xlane.xlu0 %800
  %v802 = vadd.f32 %v539, %v540
  %803 = vadd.xlane.f32.xlu0 %v802
  %v804 = vpop.xlane.xlu0 %803
  %v805 = vadd.f32 %v541, %v542
  %806 = vadd.xlane.f32.xlu0 %v805
  %v807 = vpop.xlane.xlu0 %806
  %v808 = vadd.f32 %v543, %v544
  %809 = vadd.xlane.f32.xlu0 %v808
  %v810 = vpop.xlane.xlu0 %809
  %v811 = vadd.f32 %v545, %v546
  %812 = vadd.xlane.f32.xlu0 %v811
  %v813 = vpop.xlane.xlu0 %812
  %v814 = vadd.f32 %v547, %v548
  %815 = vadd.xlane.f32.xlu0 %v814
  %v816 = vpop.xlane.xlu0 %815
  %v817 = vadd.f32 %v549, %v550
  %818 = vadd.xlane.f32.xlu0 %v817
  %v819 = vpop.xlane.xlu0 %818
  %v820 = vadd.f32 %v551, %v552
  %821 = vadd.xlane.f32.xlu0 %v820
  %v822 = vpop.xlane.xlu0 %821
  %v823 = vadd.f32 %v553, %v554
  %824 = vadd.xlane.f32.xlu0 %v823
  %v825 = vpop.xlane.xlu0 %824
  %v826 = vadd.f32 %v555, %v556
  %827 = vadd.xlane.f32.xlu0 %v826
  %v828 = vpop.xlane.xlu0 %827
  %v829 = vadd.f32 %v557, %v558
  %830 = vadd.xlane.f32.xlu0 %v829
  %v831 = vpop.xlane.xlu0 %830
  %v832 = vadd.f32 %v559, %v560
  %833 = vadd.xlane.f32.xlu0 %v832
  %v834 = vpop.xlane.xlu0 %833
  %v835 = vadd.f32 %v561, %v562
  %836 = vadd.xlane.f32.xlu0 %v835
  %v837 = vpop.xlane.xlu0 %836
  %v838 = vadd.f32 %v563, %v564
  %839 = vadd.xlane.f32.xlu0 %v838
  %v840 = vpop.xlane.xlu0 %839
  %v841 = vadd.f32 %v565, %v566
  %842 = vadd.xlane.f32.xlu0 %v841
  %v843 = vpop.xlane.xlu0 %842
  %v844 = vadd.f32 %v567, %v568
  %845 = vadd.xlane.f32.xlu0 %v844
  %v846 = vpop.xlane.xlu0 %845
  %v847 = vadd.f32 %v569, %v570
  %848 = vadd.xlane.f32.xlu0 %v847
  %v849 = vpop.xlane.xlu0 %848
  %v850 = vadd.f32 %v571, %v572
  %851 = vadd.xlane.f32.xlu0 %v850
  %v852 = vpop.xlane.xlu0 %851
  %v853 = vadd.f32 %v573, %v574
  %854 = vadd.xlane.f32.xlu0 %v853
  %v855 = vpop.xlane.xlu0 %854
  %v856 = vadd.f32 %v575, %v576
  %857 = vadd.xlane.f32.xlu0 %v856
  %v858 = vpop.xlane.xlu0 %857
  %v859 = vadd.f32 %v577, %v578
  %860 = vadd.xlane.f32.xlu0 %v859
  %v861 = vpop.xlane.xlu0 %860
  %v862 = vadd.f32 %v579, %v580
  %863 = vadd.xlane.f32.xlu0 %v862
  %v864 = vpop.xlane.xlu0 %863
  %v865 = vadd.f32 %v581, %v582
  %866 = vadd.xlane.f32.xlu0 %v865
  %v867 = vpop.xlane.xlu0 %866
  %v868 = vadd.f32 %v583, %v584
  %869 = vadd.xlane.f32.xlu0 %v868
  %v870 = vpop.xlane.xlu0 %869
  %v871 = vadd.f32 %v585, %v586
  %872 = vadd.xlane.f32.xlu0 %v871
  %v873 = vpop.xlane.xlu0 %872
  %v874 = vadd.f32 %v587, %v588
  %875 = vadd.xlane.f32.xlu0 %v874
  %v876 = vpop.xlane.xlu0 %875
  %v877 = vadd.f32 %v589, %v590
  %878 = vadd.xlane.f32.xlu0 %v877
  %v879 = vpop.xlane.xlu0 %878
  %v880 = vadd.f32 %v591, %v592
  %881 = vadd.xlane.f32.xlu0 %v880
  %v882 = vpop.xlane.xlu0 %881
  %v883 = vadd.f32 %v593, %v594
  %884 = vadd.xlane.f32.xlu0 %v883
  %v885 = vpop.xlane.xlu0 %884
  %v886 = vadd.f32 %v595, %v596
  %887 = vadd.xlane.f32.xlu0 %v886
  %v888 = vpop.xlane.xlu0 %887
  %v889 = vadd.f32 %v597, %v598
  %890 = vadd.xlane.f32.xlu0 %v889
  %v891 = vpop.xlane.xlu0 %890
  %v892 = vadd.f32 %v599, %v600
  %893 = vadd.xlane.f32.xlu0 %v892
  %v894 = vpop.xlane.xlu0 %893
  %v895 = vadd.f32 %v601, %v602
  %896 = vadd.xlane.f32.xlu0 %v895
  %v897 = vpop.xlane.xlu0 %896
  %v898 = vadd.f32 %v603, %v604
  %899 = vadd.xlane.f32.xlu0 %v898
  %v900 = vpop.xlane.xlu0 %899
  %v901 = vadd.f32 %v605, %v606
  %902 = vadd.xlane.f32.xlu0 %v901
  %v903 = vpop.xlane.xlu0 %902
  %v904 = vadd.f32 %v607, %v608
  %905 = vadd.xlane.f32.xlu0 %v904
  %v906 = vpop.xlane.xlu0 %905
  %v907 = vadd.f32 %v609, %v610
  %908 = vadd.xlane.f32.xlu0 %v907
  %v909 = vpop.xlane.xlu0 %908
  %v910 = vadd.f32 %v611, %v612
  %911 = vadd.xlane.f32.xlu0 %v910
  %v912 = vpop.xlane.xlu0 %911
  %v913 = vadd.f32 %v613, %v614
  %914 = vadd.xlane.f32.xlu0 %v913
  %v915 = vpop.xlane.xlu0 %914
  %v916 = vadd.f32 %v615, %v616
  %917 = vadd.xlane.f32.xlu0 %v916
  %v918 = vpop.xlane.xlu0 %917
  %v919 = vadd.f32 %v617, %v618
  %920 = vadd.xlane.f32.xlu0 %v919
  %v921 = vpop.xlane.xlu0 %920
  %v922 = vadd.f32 %v619, %v620
  %923 = vadd.xlane.f32.xlu0 %v922
  %v924 = vpop.xlane.xlu0 %923
  %v925 = vadd.f32 %v621, %v622
  %926 = vadd.xlane.f32.xlu0 %v925
  %v927 = vpop.xlane.xlu0 %926
  %v928 = vadd.f32 %v623, %v624
  %929 = vadd.xlane.f32.xlu0 %v928
  %v930 = vpop.xlane.xlu0 %929
  %v931 = vadd.f32 %v625, %v626
  %932 = vadd.xlane.f32.xlu0 %v931
  %v933 = vpop.xlane.xlu0 %932
  %v934 = vadd.f32 %v627, %v628
  %935 = vadd.xlane.f32.xlu0 %v934
  %v936 = vpop.xlane.xlu0 %935
  %v937 = vadd.f32 %v629, %v630
  %938 = vadd.xlane.f32.xlu0 %v937
  %v939 = vpop.xlane.xlu0 %938
  %v940 = vadd.f32 %v631, %v632
  %941 = vadd.xlane.f32.xlu0 %v940
  %v942 = vpop.xlane.xlu0 %941
  %v943 = vadd.f32 %v633, %v634
  %944 = vadd.xlane.f32.xlu0 %v943
  %v945 = vpop.xlane.xlu0 %944
  %v946 = vadd.f32 %v635, %v636
  %947 = vadd.xlane.f32.xlu0 %v946
  %v948 = vpop.xlane.xlu0 %947
  %v949 = vadd.f32 %v637, %v638
  %950 = vadd.xlane.f32.xlu0 %v949
  %v951 = vpop.xlane.xlu0 %950
  %v952 = vadd.f32 %v639, %v640
  %953 = vadd.xlane.f32.xlu0 %v952
  %v954 = vpop.xlane.xlu0 %953
  %v955 = vadd.f32 %v641, %v642
  %956 = vadd.xlane.f32.xlu0 %v955
  %v957 = vpop.xlane.xlu0 %956
  %v958 = vadd.f32 %v643, %v644
  %959 = vadd.xlane.f32.xlu0 %v958
  %v960 = vpop.xlane.xlu0 %959
  %v961 = vadd.f32 %v645, %v646
  %962 = vadd.xlane.f32.xlu0 %v961
  %v963 = vpop.xlane.xlu0 %962
  %v964 = vadd.f32 %v647, %v648
  %965 = vadd.xlane.f32.xlu0 %v964
  %v966 = vpop.xlane.xlu0 %965
  %v967 = vadd.f32 %v649, %v650
  %968 = vadd.xlane.f32.xlu0 %v967
  %v969 = vpop.xlane.xlu0 %968
  %v970 = vadd.f32 %v651, %v652
  %971 = vadd.xlane.f32.xlu0 %v970
  %v972 = vpop.xlane.xlu0 %971
  %v973 = vadd.f32 %v653, %v654
  %974 = vadd.xlane.f32.xlu0 %v973
  %v975 = vpop.xlane.xlu0 %974
  %v976 = vadd.f32 %v655, %v656
  %977 = vadd.xlane.f32.xlu0 %v976
  %v978 = vpop.xlane.xlu0 %977
  %v979 = vadd.f32 %v657, %v658
  %980 = vadd.xlane.f32.xlu0 %v979
  %v981 = vpop.xlane.xlu0 %980
  %v982 = vadd.f32 %v659, %v660
  %983 = vadd.xlane.f32.xlu0 %v982
  %v984 = vpop.xlane.xlu0 %983
  %v985 = vadd.f32 %v661, %v662
  %986 = vadd.xlane.f32.xlu0 %v985
  %v987 = vpop.xlane.xlu0 %986
  %v988 = vadd.f32 %v663, %v664
  %989 = vadd.xlane.f32.xlu0 %v988
  %v990 = vpop.xlane.xlu0 %989
  %v991 = vadd.f32 %v665, %v666
  %992 = vadd.xlane.f32.xlu0 %v991
  %v993 = vpop.xlane.xlu0 %992
  %v994 = vadd.f32 %v667, %v668
  %995 = vadd.xlane.f32.xlu0 %v994
  %v996 = vpop.xlane.xlu0 %995
  %v997 = vadd.f32 %v669, %v670
  %998 = vadd.xlane.f32.xlu0 %v997
  %v999 = vpop.xlane.xlu0 %998
  %v1000 = vadd.f32 %v671, %v672
  %1001 = vadd.xlane.f32.xlu0 %v1000
  %v1002 = vpop.xlane.xlu0 %1001
  %v1003 = vadd.f32 %v673, %v674
  %1004 = vadd.xlane.f32.xlu0 %v1003
  %v1005 = vpop.xlane.xlu0 %1004
  %v1006 = vadd.f32 %v675, %v676
  %1007 = vadd.xlane.f32.xlu0 %v1006
  %v1008 = vpop.xlane.xlu0 %1007
  %v1009 = vadd.f32 %v677, %v678
  %1010 = vadd.xlane.f32.xlu0 %v1009
  %v1011 = vpop.xlane.xlu0 %1010
  %v1012 = vadd.f32 %v679, %v680
  %1013 = vadd.xlane.f32.xlu0 %v1012
  %v1014 = vpop.xlane.xlu0 %1013
  %v1015 = vadd.f32 %v681, %v682
  %1016 = vadd.xlane.f32.xlu0 %v1015
  %v1017 = vpop.xlane.xlu0 %1016
  %v1018 = vadd.f32 %v683, %v684
  %1019 = vadd.xlane.f32.xlu0 %v1018
  %v1020 = vpop.xlane.xlu0 %1019
  %v1021 = vadd.f32 %v685, %v686
  %1022 = vadd.xlane.f32.xlu0 %v1021
  %v1023 = vpop.xlane.xlu0 %1022
  %v1024 = vadd.f32 %v687, %v688
  %1025 = vadd.xlane.f32.xlu0 %v1024
  %v1026 = vpop.xlane.xlu0 %1025
  %v1027 = vadd.f32 %v689, %v690
  %1028 = vadd.xlane.f32.xlu0 %v1027
  %v1029 = vpop.xlane.xlu0 %1028
  %v1030 = vadd.f32 %v691, %v692
  %1031 = vadd.xlane.f32.xlu0 %v1030
  %v1032 = vpop.xlane.xlu0 %1031
  %v1033 = vadd.f32 %v693, %v694
  %1034 = vadd.xlane.f32.xlu0 %v1033
  %v1035 = vpop.xlane.xlu0 %1034
  %v1036 = vadd.f32 %v695, %v696
  %1037 = vadd.xlane.f32.xlu0 %v1036
  %v1038 = vpop.xlane.xlu0 %1037
  %v1039 = vadd.f32 %v697, %v698
  %1040 = vadd.xlane.f32.xlu0 %v1039
  %v1041 = vpop.xlane.xlu0 %1040
  %v1042 = vadd.f32 %v699, %v700
  %1043 = vadd.xlane.f32.xlu0 %v1042
  %v1044 = vpop.xlane.xlu0 %1043
  %v1045 = vadd.f32 %v701, %v702
  %1046 = vadd.xlane.f32.xlu0 %v1045
  %v1047 = vpop.xlane.xlu0 %1046
  %v1048 = vadd.f32 %v703, %v704
  %1049 = vadd.xlane.f32.xlu0 %v1048
  %v1050 = vpop.xlane.xlu0 %1049
  %v1051 = vadd.f32 %v705, %v706
  %1052 = vadd.xlane.f32.xlu0 %v1051
  %v1053 = vpop.xlane.xlu0 %1052
  %v1054 = vadd.f32 %v707, %v708
  %1055 = vadd.xlane.f32.xlu0 %v1054
  %v1056 = vpop.xlane.xlu0 %1055
  %v1057 = vadd.f32 %v709, %v710
  %1058 = vadd.xlane.f32.xlu0 %v1057
  %v1059 = vpop.xlane.xlu0 %1058
  %v1060 = vadd.f32 %v711, %v712
  %1061 = vadd.xlane.f32.xlu0 %v1060
  %v1062 = vpop.xlane.xlu0 %1061
  %v1063 = vadd.f32 %v713, %v714
  %1064 = vadd.xlane.f32.xlu0 %v1063
  %v1065 = vpop.xlane.xlu0 %1064
  %v1066 = vadd.f32 %v715, %v716
  %1067 = vadd.xlane.f32.xlu0 %v1066
  %v1068 = vpop.xlane.xlu0 %1067
  %v1069 = vadd.f32 %v717, %v718
  %1070 = vadd.xlane.f32.xlu0 %v1069
  %v1071 = vpop.xlane.xlu0 %1070
  %v1072 = vadd.f32 %v719, %v720
  %1073 = vadd.xlane.f32.xlu0 %v1072
  %v1074 = vpop.xlane.xlu0 %1073
  %v1075 = vadd.f32 %v721, %v722
  %1076 = vadd.xlane.f32.xlu0 %v1075
  %v1077 = vpop.xlane.xlu0 %1076
  %v1078 = vadd.f32 %v723, %v724
  %1079 = vadd.xlane.f32.xlu0 %v1078
  %v1080 = vpop.xlane.xlu0 %1079
  %v1081 = vadd.f32 %v725, %v726
  %1082 = vadd.xlane.f32.xlu0 %v1081
  %v1083 = vpop.xlane.xlu0 %1082
  %v1084 = vadd.f32 %v727, %v728
  %1085 = vadd.xlane.f32.xlu0 %v1084
  %v1086 = vpop.xlane.xlu0 %1085
  %v1087 = vadd.f32 %v729, %v730
  %1088 = vadd.xlane.f32.xlu0 %v1087
  %v1089 = vpop.xlane.xlu0 %1088
  %v1090 = vadd.f32 %v731, %v732
  %1091 = vadd.xlane.f32.xlu0 %v1090
  %v1092 = vpop.xlane.xlu0 %1091
  %v1093 = vadd.f32 %v733, %v734
  %1094 = vadd.xlane.f32.xlu0 %v1093
  %v1095 = vpop.xlane.xlu0 %1094
  %v1096 = vadd.f32 %v735, %v736
  %1097 = vadd.xlane.f32.xlu0 %v1096
  %v1098 = vpop.xlane.xlu0 %1097
  %v1099 = vadd.f32 %v737, %v738
  %1100 = vadd.xlane.f32.xlu0 %v1099
  %v1101 = vpop.xlane.xlu0 %1100
  %v1102 = vadd.f32 %v739, %v740
  %1103 = vadd.xlane.f32.xlu0 %v1102
  %v1104 = vpop.xlane.xlu0 %1103
  %v1105 = vadd.f32 %v741, %v742
  %1106 = vadd.xlane.f32.xlu0 %v1105
  %v1107 = vpop.xlane.xlu0 %1106
  %v1108 = vadd.f32 %v743, %v744
  %1109 = vadd.xlane.f32.xlu0 %v1108
  %v1110 = vpop.xlane.xlu0 %1109
  %v1111 = vadd.f32 %v745, %v746
  %1112 = vadd.xlane.f32.xlu0 %v1111
  %v1113 = vpop.xlane.xlu0 %1112
  %v1114 = vadd.f32 %v747, %v748
  %1115 = vadd.xlane.f32.xlu0 %v1114
  %v1116 = vpop.xlane.xlu0 %1115
  %v1117 = vadd.f32 %v749, %v750
  %1118 = vadd.xlane.f32.xlu0 %v1117
  %v1119 = vpop.xlane.xlu0 %1118
  %v1120 = vadd.f32 %v751, %v752
  %1121 = vadd.xlane.f32.xlu0 %v1120
  %v1122 = vpop.xlane.xlu0 %1121
  %v1123 = vadd.f32 %v753, %v754
  %1124 = vadd.xlane.f32.xlu0 %v1123
  %v1125 = vpop.xlane.xlu0 %1124
  %v1126 = vadd.f32 %v755, %v756
  %1127 = vadd.xlane.f32.xlu0 %v1126
  %v1128 = vpop.xlane.xlu0 %1127
  %v1129 = vadd.f32 %v757, %v758
  %1130 = vadd.xlane.f32.xlu0 %v1129
  %v1131 = vpop.xlane.xlu0 %1130
  %v1132 = vadd.f32 %v759, %v760
  %1133 = vadd.xlane.f32.xlu0 %v1132
  %v1134 = vpop.xlane.xlu0 %1133
  %v1135 = vadd.f32 %v761, %v762
  %1136 = vadd.xlane.f32.xlu0 %v1135
  %v1137 = vpop.xlane.xlu0 %1136
  %v1138 = vadd.f32 %v763, %v764
  %1139 = vadd.xlane.f32.xlu0 %v1138
  %v1140 = vpop.xlane.xlu0 %1139
  %v1141 = vadd.f32 %v765, %v766
  %1142 = vadd.xlane.f32.xlu0 %v1141
  %v1143 = vpop.xlane.xlu0 %1142
  %v1144 = vadd.f32 %v767, %v768
  %1145 = vadd.xlane.f32.xlu0 %v1144
  %v1146 = vpop.xlane.xlu0 %1145
  %v1147 = vadd.f32 %v769, %v770
  %1148 = vadd.xlane.f32.xlu0 %v1147
  %v1149 = vpop.xlane.xlu0 %1148
  %v1150 = vadd.f32 %v771, %v772
  %1151 = vadd.xlane.f32.xlu0 %v1150
  %v1152 = vpop.xlane.xlu0 %1151
  %v1153 = vadd.f32 %v773, %v774
  %1154 = vadd.xlane.f32.xlu0 %v1153
  %v1155 = vpop.xlane.xlu0 %1154
  %v1156 = vadd.f32 %v775, %v776
  %1157 = vadd.xlane.f32.xlu0 %v1156
  %v1158 = vpop.xlane.xlu0 %1157
  %v1159 = vadd.f32 %v777, %v778
  %1160 = vadd.xlane.f32.xlu0 %v1159
  %v1161 = vpop.xlane.xlu0 %1160
  %v1162 = vadd.f32 %v779, %v780
  %1163 = vadd.xlane.f32.xlu0 %v1162
  %v1164 = vpop.xlane.xlu0 %1163
  %v1293 = vlaneseq
  %v1294 = vand.u32 %v1293, 127
  %v1295 = vlaneseq
  %v1296 = vshrl.u32 %v1295, 7
  %v1297 = vsub.s32 %v1294, %v1296
  %v1298 = vrot.slane %v783, %v1297
  %v1299 = vadd.s32 %v1294, 4294967288
  %v1300 = vlaneseq
  %v1301 = vshrl.u32 %v1300, 7
  %v1302 = vsub.s32 %v1299, %v1301
  %v1303 = vrot.slane %v786, %v1302
  %vm1304 = vcmask 130112
  %v1305 = vsel %vm1304, %v1303, %v1298
  %v1306 = vadd.s32 %v1294, 4294967280
  %v1307 = vlaneseq
  %v1308 = vshrl.u32 %v1307, 7
  %v1309 = vsub.s32 %v1306, %v1308
  %v1310 = vrot.slane %v789, %v1309
  %vm1311 = vcmask 195712
  %v1312 = vsel %vm1311, %v1310, %v1305
  %v1313 = vadd.s32 %v1294, 4294967272
  %v1314 = vlaneseq
  %v1315 = vshrl.u32 %v1314, 7
  %v1316 = vsub.s32 %v1313, %v1315
  %v1317 = vrot.slane %v792, %v1316
  %vm1318 = vcmask 261312
  %v1319 = vsel %vm1318, %v1317, %v1312
  %v1320 = vlaneseq
  %v1321 = vshrl.u32 %v1320, 7
  %v1322 = vsub.s32 %v1294, %v1321
  %v1323 = vrot.slane %v795, %v1322
  %v1324 = vlaneseq
  %v1325 = vshrl.u32 %v1324, 7
  %v1326 = vsub.s32 %v1299, %v1325
  %v1327 = vrot.slane %v798, %v1326
  %v1328 = vsel %vm1304, %v1327, %v1323
  %v1329 = vlaneseq
  %v1330 = vshrl.u32 %v1329, 7
  %v1331 = vsub.s32 %v1306, %v1330
  %v1332 = vrot.slane %v801, %v1331
  %v1333 = vsel %vm1311, %v1332, %v1328
  %v1334 = vlaneseq
  %v1335 = vshrl.u32 %v1334, 7
  %v1336 = vsub.s32 %v1313, %v1335
  %v1337 = vrot.slane %v804, %v1336
  %v1338 = vsel %vm1318, %v1337, %v1333
  %v1339 = vlaneseq
  %v1340 = vshrl.u32 %v1339, 7
  %v1341 = vsub.s32 %v1294, %v1340
  %v1342 = vrot.slane %v807, %v1341
  %v1343 = vlaneseq
  %v1344 = vshrl.u32 %v1343, 7
  %v1345 = vsub.s32 %v1299, %v1344
  %v1346 = vrot.slane %v810, %v1345
  %v1347 = vsel %vm1304, %v1346, %v1342
  %v1348 = vlaneseq
  %v1349 = vshrl.u32 %v1348, 7
  %v1350 = vsub.s32 %v1306, %v1349
  %v1351 = vrot.slane %v813, %v1350
  %v1352 = vsel %vm1311, %v1351, %v1347
  %v1353 = vlaneseq
  %v1354 = vshrl.u32 %v1353, 7
  %v1355 = vsub.s32 %v1313, %v1354
  %v1356 = vrot.slane %v816, %v1355
  %v1357 = vsel %vm1318, %v1356, %v1352
  %v1358 = vlaneseq
  %v1359 = vshrl.u32 %v1358, 7
  %v1360 = vsub.s32 %v1294, %v1359
  %v1361 = vrot.slane %v819, %v1360
  %v1362 = vlaneseq
  %v1363 = vshrl.u32 %v1362, 7
  %v1364 = vsub.s32 %v1299, %v1363
  %v1365 = vrot.slane %v822, %v1364
  %v1366 = vsel %vm1304, %v1365, %v1361
  %v1367 = vlaneseq
  %v1368 = vshrl.u32 %v1367, 7
  %v1369 = vsub.s32 %v1306, %v1368
  %v1370 = vrot.slane %v825, %v1369
  %v1371 = vsel %vm1311, %v1370, %v1366
  %v1372 = vlaneseq
  %v1373 = vshrl.u32 %v1372, 7
  %v1374 = vsub.s32 %v1313, %v1373
  %v1375 = vrot.slane %v828, %v1374
  %v1376 = vsel %vm1318, %v1375, %v1371
  %v1377 = vlaneseq
  %v1378 = vshrl.u32 %v1377, 7
  %v1379 = vsub.s32 %v1294, %v1378
  %v1380 = vrot.slane %v831, %v1379
  %v1381 = vlaneseq
  %v1382 = vshrl.u32 %v1381, 7
  %v1383 = vsub.s32 %v1299, %v1382
  %v1384 = vrot.slane %v834, %v1383
  %v1385 = vsel %vm1304, %v1384, %v1380
  %v1386 = vlaneseq
  %v1387 = vshrl.u32 %v1386, 7
  %v1388 = vsub.s32 %v1306, %v1387
  %v1389 = vrot.slane %v837, %v1388
  %v1390 = vsel %vm1311, %v1389, %v1385
  %v1391 = vlaneseq
  %v1392 = vshrl.u32 %v1391, 7
  %v1393 = vsub.s32 %v1313, %v1392
  %v1394 = vrot.slane %v840, %v1393
  %v1395 = vsel %vm1318, %v1394, %v1390
  %v1396 = vlaneseq
  %v1397 = vshrl.u32 %v1396, 7
  %v1398 = vsub.s32 %v1294, %v1397
  %v1399 = vrot.slane %v843, %v1398
  %v1400 = vlaneseq
  %v1401 = vshrl.u32 %v1400, 7
  %v1402 = vsub.s32 %v1299, %v1401
  %v1403 = vrot.slane %v846, %v1402
  %v1404 = vsel %vm1304, %v1403, %v1399
  %v1405 = vlaneseq
  %v1406 = vshrl.u32 %v1405, 7
  %v1407 = vsub.s32 %v1306, %v1406
  %v1408 = vrot.slane %v849, %v1407
  %v1409 = vsel %vm1311, %v1408, %v1404
  %v1410 = vlaneseq
  %v1411 = vshrl.u32 %v1410, 7
  %v1412 = vsub.s32 %v1313, %v1411
  %v1413 = vrot.slane %v852, %v1412
  %v1414 = vsel %vm1318, %v1413, %v1409
  %v1415 = vlaneseq
  %v1416 = vshrl.u32 %v1415, 7
  %v1417 = vsub.s32 %v1294, %v1416
  %v1418 = vrot.slane %v855, %v1417
  %v1419 = vlaneseq
  %v1420 = vshrl.u32 %v1419, 7
  %v1421 = vsub.s32 %v1299, %v1420
  %v1422 = vrot.slane %v858, %v1421
  %v1423 = vsel %vm1304, %v1422, %v1418
  %v1424 = vlaneseq
  %v1425 = vshrl.u32 %v1424, 7
  %v1426 = vsub.s32 %v1306, %v1425
  %v1427 = vrot.slane %v861, %v1426
  %v1428 = vsel %vm1311, %v1427, %v1423
  %v1429 = vlaneseq
  %v1430 = vshrl.u32 %v1429, 7
  %v1431 = vsub.s32 %v1313, %v1430
  %v1432 = vrot.slane %v864, %v1431
  %v1433 = vsel %vm1318, %v1432, %v1428
  %v1434 = vlaneseq
  %v1435 = vshrl.u32 %v1434, 7
  %v1436 = vsub.s32 %v1294, %v1435
  %v1437 = vrot.slane %v867, %v1436
  %v1438 = vlaneseq
  %v1439 = vshrl.u32 %v1438, 7
  %v1440 = vsub.s32 %v1299, %v1439
  %v1441 = vrot.slane %v870, %v1440
  %v1442 = vsel %vm1304, %v1441, %v1437
  %v1443 = vlaneseq
  %v1444 = vshrl.u32 %v1443, 7
  %v1445 = vsub.s32 %v1306, %v1444
  %v1446 = vrot.slane %v873, %v1445
  %v1447 = vsel %vm1311, %v1446, %v1442
  %v1448 = vlaneseq
  %v1449 = vshrl.u32 %v1448, 7
  %v1450 = vsub.s32 %v1313, %v1449
  %v1451 = vrot.slane %v876, %v1450
  %v1452 = vsel %vm1318, %v1451, %v1447
  %v1453 = vlaneseq
  %v1454 = vshrl.u32 %v1453, 7
  %v1455 = vsub.s32 %v1294, %v1454
  %v1456 = vrot.slane %v879, %v1455
  %v1457 = vlaneseq
  %v1458 = vshrl.u32 %v1457, 7
  %v1459 = vsub.s32 %v1299, %v1458
  %v1460 = vrot.slane %v882, %v1459
  %v1461 = vsel %vm1304, %v1460, %v1456
  %v1462 = vlaneseq
  %v1463 = vshrl.u32 %v1462, 7
  %v1464 = vsub.s32 %v1306, %v1463
  %v1465 = vrot.slane %v885, %v1464
  %v1466 = vsel %vm1311, %v1465, %v1461
  %v1467 = vlaneseq
  %v1468 = vshrl.u32 %v1467, 7
  %v1469 = vsub.s32 %v1313, %v1468
  %v1470 = vrot.slane %v888, %v1469
  %v1471 = vsel %vm1318, %v1470, %v1466
  %v1472 = vlaneseq
  %v1473 = vshrl.u32 %v1472, 7
  %v1474 = vsub.s32 %v1294, %v1473
  %v1475 = vrot.slane %v891, %v1474
  %v1476 = vlaneseq
  %v1477 = vshrl.u32 %v1476, 7
  %v1478 = vsub.s32 %v1299, %v1477
  %v1479 = vrot.slane %v894, %v1478
  %v1480 = vsel %vm1304, %v1479, %v1475
  %v1481 = vlaneseq
  %v1482 = vshrl.u32 %v1481, 7
  %v1483 = vsub.s32 %v1306, %v1482
  %v1484 = vrot.slane %v897, %v1483
  %v1485 = vsel %vm1311, %v1484, %v1480
  %v1486 = vlaneseq
  %v1487 = vshrl.u32 %v1486, 7
  %v1488 = vsub.s32 %v1313, %v1487
  %v1489 = vrot.slane %v900, %v1488
  %v1490 = vsel %vm1318, %v1489, %v1485
  %v1491 = vlaneseq
  %v1492 = vshrl.u32 %v1491, 7
  %v1493 = vsub.s32 %v1294, %v1492
  %v1494 = vrot.slane %v903, %v1493
  %v1495 = vlaneseq
  %v1496 = vshrl.u32 %v1495, 7
  %v1497 = vsub.s32 %v1299, %v1496
  %v1498 = vrot.slane %v906, %v1497
  %v1499 = vsel %vm1304, %v1498, %v1494
  %v1500 = vlaneseq
  %v1501 = vshrl.u32 %v1500, 7
  %v1502 = vsub.s32 %v1306, %v1501
  %v1503 = vrot.slane %v909, %v1502
  %v1504 = vsel %vm1311, %v1503, %v1499
  %v1505 = vlaneseq
  %v1506 = vshrl.u32 %v1505, 7
  %v1507 = vsub.s32 %v1313, %v1506
  %v1508 = vrot.slane %v912, %v1507
  %v1509 = vsel %vm1318, %v1508, %v1504
  %v1510 = vlaneseq
  %v1511 = vshrl.u32 %v1510, 7
  %v1512 = vsub.s32 %v1294, %v1511
  %v1513 = vrot.slane %v915, %v1512
  %v1514 = vlaneseq
  %v1515 = vshrl.u32 %v1514, 7
  %v1516 = vsub.s32 %v1299, %v1515
  %v1517 = vrot.slane %v918, %v1516
  %v1518 = vsel %vm1304, %v1517, %v1513
  %v1519 = vlaneseq
  %v1520 = vshrl.u32 %v1519, 7
  %v1521 = vsub.s32 %v1306, %v1520
  %v1522 = vrot.slane %v921, %v1521
  %v1523 = vsel %vm1311, %v1522, %v1518
  %v1524 = vlaneseq
  %v1525 = vshrl.u32 %v1524, 7
  %v1526 = vsub.s32 %v1313, %v1525
  %v1527 = vrot.slane %v924, %v1526
  %v1528 = vsel %vm1318, %v1527, %v1523
  %v1529 = vlaneseq
  %v1530 = vshrl.u32 %v1529, 7
  %v1531 = vsub.s32 %v1294, %v1530
  %v1532 = vrot.slane %v927, %v1531
  %v1533 = vlaneseq
  %v1534 = vshrl.u32 %v1533, 7
  %v1535 = vsub.s32 %v1299, %v1534
  %v1536 = vrot.slane %v930, %v1535
  %v1537 = vsel %vm1304, %v1536, %v1532
  %v1538 = vlaneseq
  %v1539 = vshrl.u32 %v1538, 7
  %v1540 = vsub.s32 %v1306, %v1539
  %v1541 = vrot.slane %v933, %v1540
  %v1542 = vsel %vm1311, %v1541, %v1537
  %v1543 = vlaneseq
  %v1544 = vshrl.u32 %v1543, 7
  %v1545 = vsub.s32 %v1313, %v1544
  %v1546 = vrot.slane %v936, %v1545
  %v1547 = vsel %vm1318, %v1546, %v1542
  %v1548 = vlaneseq
  %v1549 = vshrl.u32 %v1548, 7
  %v1550 = vsub.s32 %v1294, %v1549
  %v1551 = vrot.slane %v939, %v1550
  %v1552 = vlaneseq
  %v1553 = vshrl.u32 %v1552, 7
  %v1554 = vsub.s32 %v1299, %v1553
  %v1555 = vrot.slane %v942, %v1554
  %v1556 = vsel %vm1304, %v1555, %v1551
  %v1557 = vlaneseq
  %v1558 = vshrl.u32 %v1557, 7
  %v1559 = vsub.s32 %v1306, %v1558
  %v1560 = vrot.slane %v945, %v1559
  %v1561 = vsel %vm1311, %v1560, %v1556
  %v1562 = vlaneseq
  %v1563 = vshrl.u32 %v1562, 7
  %v1564 = vsub.s32 %v1313, %v1563
  %v1565 = vrot.slane %v948, %v1564
  %v1566 = vsel %vm1318, %v1565, %v1561
  %v1567 = vlaneseq
  %v1568 = vshrl.u32 %v1567, 7
  %v1569 = vsub.s32 %v1294, %v1568
  %v1570 = vrot.slane %v951, %v1569
  %v1571 = vlaneseq
  %v1572 = vshrl.u32 %v1571, 7
  %v1573 = vsub.s32 %v1299, %v1572
  %v1574 = vrot.slane %v954, %v1573
  %v1575 = vsel %vm1304, %v1574, %v1570
  %v1576 = vlaneseq
  %v1577 = vshrl.u32 %v1576, 7
  %v1578 = vsub.s32 %v1306, %v1577
  %v1579 = vrot.slane %v957, %v1578
  %v1580 = vsel %vm1311, %v1579, %v1575
  %v1581 = vlaneseq
  %v1582 = vshrl.u32 %v1581, 7
  %v1583 = vsub.s32 %v1313, %v1582
  %v1584 = vrot.slane %v960, %v1583
  %v1585 = vsel %vm1318, %v1584, %v1580
  %v1586 = vlaneseq
  %v1587 = vshrl.u32 %v1586, 7
  %v1588 = vsub.s32 %v1294, %v1587
  %v1589 = vrot.slane %v963, %v1588
  %v1590 = vlaneseq
  %v1591 = vshrl.u32 %v1590, 7
  %v1592 = vsub.s32 %v1299, %v1591
  %v1593 = vrot.slane %v966, %v1592
  %v1594 = vsel %vm1304, %v1593, %v1589
  %v1595 = vlaneseq
  %v1596 = vshrl.u32 %v1595, 7
  %v1597 = vsub.s32 %v1306, %v1596
  %v1598 = vrot.slane %v969, %v1597
  %v1599 = vsel %vm1311, %v1598, %v1594
  %v1600 = vlaneseq
  %v1601 = vshrl.u32 %v1600, 7
  %v1602 = vsub.s32 %v1313, %v1601
  %v1603 = vrot.slane %v972, %v1602
  %v1604 = vsel %vm1318, %v1603, %v1599
  %v1605 = vlaneseq
  %v1606 = vshrl.u32 %v1605, 7
  %v1607 = vsub.s32 %v1294, %v1606
  %v1608 = vrot.slane %v975, %v1607
  %v1609 = vlaneseq
  %v1610 = vshrl.u32 %v1609, 7
  %v1611 = vsub.s32 %v1299, %v1610
  %v1612 = vrot.slane %v978, %v1611
  %v1613 = vsel %vm1304, %v1612, %v1608
  %v1614 = vlaneseq
  %v1615 = vshrl.u32 %v1614, 7
  %v1616 = vsub.s32 %v1306, %v1615
  %v1617 = vrot.slane %v981, %v1616
  %v1618 = vsel %vm1311, %v1617, %v1613
  %v1619 = vlaneseq
  %v1620 = vshrl.u32 %v1619, 7
  %v1621 = vsub.s32 %v1313, %v1620
  %v1622 = vrot.slane %v984, %v1621
  %v1623 = vsel %vm1318, %v1622, %v1618
  %v1624 = vlaneseq
  %v1625 = vshrl.u32 %v1624, 7
  %v1626 = vsub.s32 %v1294, %v1625
  %v1627 = vrot.slane %v987, %v1626
  %v1628 = vlaneseq
  %v1629 = vshrl.u32 %v1628, 7
  %v1630 = vsub.s32 %v1299, %v1629
  %v1631 = vrot.slane %v990, %v1630
  %v1632 = vsel %vm1304, %v1631, %v1627
  %v1633 = vlaneseq
  %v1634 = vshrl.u32 %v1633, 7
  %v1635 = vsub.s32 %v1306, %v1634
  %v1636 = vrot.slane %v993, %v1635
  %v1637 = vsel %vm1311, %v1636, %v1632
  %v1638 = vlaneseq
  %v1639 = vshrl.u32 %v1638, 7
  %v1640 = vsub.s32 %v1313, %v1639
  %v1641 = vrot.slane %v996, %v1640
  %v1642 = vsel %vm1318, %v1641, %v1637
  %v1643 = vlaneseq
  %v1644 = vshrl.u32 %v1643, 7
  %v1645 = vsub.s32 %v1294, %v1644
  %v1646 = vrot.slane %v999, %v1645
  %v1647 = vlaneseq
  %v1648 = vshrl.u32 %v1647, 7
  %v1649 = vsub.s32 %v1299, %v1648
  %v1650 = vrot.slane %v1002, %v1649
  %v1651 = vsel %vm1304, %v1650, %v1646
  %v1652 = vlaneseq
  %v1653 = vshrl.u32 %v1652, 7
  %v1654 = vsub.s32 %v1306, %v1653
  %v1655 = vrot.slane %v1005, %v1654
  %v1656 = vsel %vm1311, %v1655, %v1651
  %v1657 = vlaneseq
  %v1658 = vshrl.u32 %v1657, 7
  %v1659 = vsub.s32 %v1313, %v1658
  %v1660 = vrot.slane %v1008, %v1659
  %v1661 = vsel %vm1318, %v1660, %v1656
  %v1662 = vlaneseq
  %v1663 = vshrl.u32 %v1662, 7
  %v1664 = vsub.s32 %v1294, %v1663
  %v1665 = vrot.slane %v1011, %v1664
  %v1666 = vlaneseq
  %v1667 = vshrl.u32 %v1666, 7
  %v1668 = vsub.s32 %v1299, %v1667
  %v1669 = vrot.slane %v1014, %v1668
  %v1670 = vsel %vm1304, %v1669, %v1665
  %v1671 = vlaneseq
  %v1672 = vshrl.u32 %v1671, 7
  %v1673 = vsub.s32 %v1306, %v1672
  %v1674 = vrot.slane %v1017, %v1673
  %v1675 = vsel %vm1311, %v1674, %v1670
  %v1676 = vlaneseq
  %v1677 = vshrl.u32 %v1676, 7
  %v1678 = vsub.s32 %v1313, %v1677
  %v1679 = vrot.slane %v1020, %v1678
  %v1680 = vsel %vm1318, %v1679, %v1675
  %v1681 = vlaneseq
  %v1682 = vshrl.u32 %v1681, 7
  %v1683 = vsub.s32 %v1294, %v1682
  %v1684 = vrot.slane %v1023, %v1683
  %v1685 = vlaneseq
  %v1686 = vshrl.u32 %v1685, 7
  %v1687 = vsub.s32 %v1299, %v1686
  %v1688 = vrot.slane %v1026, %v1687
  %v1689 = vsel %vm1304, %v1688, %v1684
  %v1690 = vlaneseq
  %v1691 = vshrl.u32 %v1690, 7
  %v1692 = vsub.s32 %v1306, %v1691
  %v1693 = vrot.slane %v1029, %v1692
  %v1694 = vsel %vm1311, %v1693, %v1689
  %v1695 = vlaneseq
  %v1696 = vshrl.u32 %v1695, 7
  %v1697 = vsub.s32 %v1313, %v1696
  %v1698 = vrot.slane %v1032, %v1697
  %v1699 = vsel %vm1318, %v1698, %v1694
  %v1700 = vlaneseq
  %v1701 = vshrl.u32 %v1700, 7
  %v1702 = vsub.s32 %v1294, %v1701
  %v1703 = vrot.slane %v1035, %v1702
  %v1704 = vlaneseq
  %v1705 = vshrl.u32 %v1704, 7
  %v1706 = vsub.s32 %v1299, %v1705
  %v1707 = vrot.slane %v1038, %v1706
  %v1708 = vsel %vm1304, %v1707, %v1703
  %v1709 = vlaneseq
  %v1710 = vshrl.u32 %v1709, 7
  %v1711 = vsub.s32 %v1306, %v1710
  %v1712 = vrot.slane %v1041, %v1711
  %v1713 = vsel %vm1311, %v1712, %v1708
  %v1714 = vlaneseq
  %v1715 = vshrl.u32 %v1714, 7
  %v1716 = vsub.s32 %v1313, %v1715
  %v1717 = vrot.slane %v1044, %v1716
  %v1718 = vsel %vm1318, %v1717, %v1713
  %v1719 = vlaneseq
  %v1720 = vshrl.u32 %v1719, 7
  %v1721 = vsub.s32 %v1294, %v1720
  %v1722 = vrot.slane %v1047, %v1721
  %v1723 = vlaneseq
  %v1724 = vshrl.u32 %v1723, 7
  %v1725 = vsub.s32 %v1299, %v1724
  %v1726 = vrot.slane %v1050, %v1725
  %v1727 = vsel %vm1304, %v1726, %v1722
  %v1728 = vlaneseq
  %v1729 = vshrl.u32 %v1728, 7
  %v1730 = vsub.s32 %v1306, %v1729
  %v1731 = vrot.slane %v1053, %v1730
  %v1732 = vsel %vm1311, %v1731, %v1727
  %v1733 = vlaneseq
  %v1734 = vshrl.u32 %v1733, 7
  %v1735 = vsub.s32 %v1313, %v1734
  %v1736 = vrot.slane %v1056, %v1735
  %v1737 = vsel %vm1318, %v1736, %v1732
  %v1738 = vlaneseq
  %v1739 = vshrl.u32 %v1738, 7
  %v1740 = vsub.s32 %v1294, %v1739
  %v1741 = vrot.slane %v1059, %v1740
  %v1742 = vlaneseq
  %v1743 = vshrl.u32 %v1742, 7
  %v1744 = vsub.s32 %v1299, %v1743
  %v1745 = vrot.slane %v1062, %v1744
  %v1746 = vsel %vm1304, %v1745, %v1741
  %v1747 = vlaneseq
  %v1748 = vshrl.u32 %v1747, 7
  %v1749 = vsub.s32 %v1306, %v1748
  %v1750 = vrot.slane %v1065, %v1749
  %v1751 = vsel %vm1311, %v1750, %v1746
  %v1752 = vlaneseq
  %v1753 = vshrl.u32 %v1752, 7
  %v1754 = vsub.s32 %v1313, %v1753
  %v1755 = vrot.slane %v1068, %v1754
  %v1756 = vsel %vm1318, %v1755, %v1751
  %v1757 = vlaneseq
  %v1758 = vshrl.u32 %v1757, 7
  %v1759 = vsub.s32 %v1294, %v1758
  %v1760 = vrot.slane %v1071, %v1759
  %v1761 = vlaneseq
  %v1762 = vshrl.u32 %v1761, 7
  %v1763 = vsub.s32 %v1299, %v1762
  %v1764 = vrot.slane %v1074, %v1763
  %v1765 = vsel %vm1304, %v1764, %v1760
  %v1766 = vlaneseq
  %v1767 = vshrl.u32 %v1766, 7
  %v1768 = vsub.s32 %v1306, %v1767
  %v1769 = vrot.slane %v1077, %v1768
  %v1770 = vsel %vm1311, %v1769, %v1765
  %v1771 = vlaneseq
  %v1772 = vshrl.u32 %v1771, 7
  %v1773 = vsub.s32 %v1313, %v1772
  %v1774 = vrot.slane %v1080, %v1773
  %v1775 = vsel %vm1318, %v1774, %v1770
  %v1776 = vlaneseq
  %v1777 = vshrl.u32 %v1776, 7
  %v1778 = vsub.s32 %v1294, %v1777
  %v1779 = vrot.slane %v1083, %v1778
  %v1780 = vlaneseq
  %v1781 = vshrl.u32 %v1780, 7
  %v1782 = vsub.s32 %v1299, %v1781
  %v1783 = vrot.slane %v1086, %v1782
  %v1784 = vsel %vm1304, %v1783, %v1779
  %v1785 = vlaneseq
  %v1786 = vshrl.u32 %v1785, 7
  %v1787 = vsub.s32 %v1306, %v1786
  %v1788 = vrot.slane %v1089, %v1787
  %v1789 = vsel %vm1311, %v1788, %v1784
  %v1790 = vlaneseq
  %v1791 = vshrl.u32 %v1790, 7
  %v1792 = vsub.s32 %v1313, %v1791
  %v1793 = vrot.slane %v1092, %v1792
  %v1794 = vsel %vm1318, %v1793, %v1789
  %v1795 = vlaneseq
  %v1796 = vshrl.u32 %v1795, 7
  %v1797 = vsub.s32 %v1294, %v1796
  %v1798 = vrot.slane %v1095, %v1797
  %v1799 = vlaneseq
  %v1800 = vshrl.u32 %v1799, 7
  %v1801 = vsub.s32 %v1299, %v1800
  %v1802 = vrot.slane %v1098, %v1801
  %v1803 = vsel %vm1304, %v1802, %v1798
  %v1804 = vlaneseq
  %v1805 = vshrl.u32 %v1804, 7
  %v1806 = vsub.s32 %v1306, %v1805
  %v1807 = vrot.slane %v1101, %v1806
  %v1808 = vsel %vm1311, %v1807, %v1803
  %v1809 = vlaneseq
  %v1810 = vshrl.u32 %v1809, 7
  %v1811 = vsub.s32 %v1313, %v1810
  %v1812 = vrot.slane %v1104, %v1811
  %v1813 = vsel %vm1318, %v1812, %v1808
  %v1814 = vlaneseq
  %v1815 = vshrl.u32 %v1814, 7
  %v1816 = vsub.s32 %v1294, %v1815
  %v1817 = vrot.slane %v1107, %v1816
  %v1818 = vlaneseq
  %v1819 = vshrl.u32 %v1818, 7
  %v1820 = vsub.s32 %v1299, %v1819
  %v1821 = vrot.slane %v1110, %v1820
  %v1822 = vsel %vm1304, %v1821, %v1817
  %v1823 = vlaneseq
  %v1824 = vshrl.u32 %v1823, 7
  %v1825 = vsub.s32 %v1306, %v1824
  %v1826 = vrot.slane %v1113, %v1825
  %v1827 = vsel %vm1311, %v1826, %v1822
  %v1828 = vlaneseq
  %v1829 = vshrl.u32 %v1828, 7
  %v1830 = vsub.s32 %v1313, %v1829
  %v1831 = vrot.slane %v1116, %v1830
  %v1832 = vsel %vm1318, %v1831, %v1827
  %v1833 = vlaneseq
  %v1834 = vshrl.u32 %v1833, 7
  %v1835 = vsub.s32 %v1294, %v1834
  %v1836 = vrot.slane %v1119, %v1835
  %v1837 = vlaneseq
  %v1838 = vshrl.u32 %v1837, 7
  %v1839 = vsub.s32 %v1299, %v1838
  %v1840 = vrot.slane %v1122, %v1839
  %v1841 = vsel %vm1304, %v1840, %v1836
  %v1842 = vlaneseq
  %v1843 = vshrl.u32 %v1842, 7
  %v1844 = vsub.s32 %v1306, %v1843
  %v1845 = vrot.slane %v1125, %v1844
  %v1846 = vsel %vm1311, %v1845, %v1841
  %v1847 = vlaneseq
  %v1848 = vshrl.u32 %v1847, 7
  %v1849 = vsub.s32 %v1313, %v1848
  %v1850 = vrot.slane %v1128, %v1849
  %v1851 = vsel %vm1318, %v1850, %v1846
  %v1852 = vlaneseq
  %v1853 = vshrl.u32 %v1852, 7
  %v1854 = vsub.s32 %v1294, %v1853
  %v1855 = vrot.slane %v1131, %v1854
  %v1856 = vlaneseq
  %v1857 = vshrl.u32 %v1856, 7
  %v1858 = vsub.s32 %v1299, %v1857
  %v1859 = vrot.slane %v1134, %v1858
  %v1860 = vsel %vm1304, %v1859, %v1855
  %v1861 = vlaneseq
  %v1862 = vshrl.u32 %v1861, 7
  %v1863 = vsub.s32 %v1306, %v1862
  %v1864 = vrot.slane %v1137, %v1863
  %v1865 = vsel %vm1311, %v1864, %v1860
  %v1866 = vlaneseq
  %v1867 = vshrl.u32 %v1866, 7
  %v1868 = vsub.s32 %v1313, %v1867
  %v1869 = vrot.slane %v1140, %v1868
  %v1870 = vsel %vm1318, %v1869, %v1865
  %v1871 = vlaneseq
  %v1872 = vshrl.u32 %v1871, 7
  %v1873 = vsub.s32 %v1294, %v1872
  %v1874 = vrot.slane %v1143, %v1873
  %v1875 = vlaneseq
  %v1876 = vshrl.u32 %v1875, 7
  %v1877 = vsub.s32 %v1299, %v1876
  %v1878 = vrot.slane %v1146, %v1877
  %v1879 = vsel %vm1304, %v1878, %v1874
  %v1880 = vlaneseq
  %v1881 = vshrl.u32 %v1880, 7
  %v1882 = vsub.s32 %v1306, %v1881
  %v1883 = vrot.slane %v1149, %v1882
  %v1884 = vsel %vm1311, %v1883, %v1879
  %v1885 = vlaneseq
  %v1886 = vshrl.u32 %v1885, 7
  %v1887 = vsub.s32 %v1313, %v1886
  %v1888 = vrot.slane %v1152, %v1887
  %v1889 = vsel %vm1318, %v1888, %v1884
  %v1890 = vlaneseq
  %v1891 = vshrl.u32 %v1890, 7
  %v1892 = vsub.s32 %v1294, %v1891
  %v1893 = vrot.slane %v1155, %v1892
  %v1894 = vlaneseq
  %v1895 = vshrl.u32 %v1894, 7
  %v1896 = vsub.s32 %v1299, %v1895
  %v1897 = vrot.slane %v1158, %v1896
  %v1898 = vsel %vm1304, %v1897, %v1893
  %v1899 = vlaneseq
  %v1900 = vshrl.u32 %v1899, 7
  %v1901 = vsub.s32 %v1306, %v1900
  %v1902 = vrot.slane %v1161, %v1901
  %v1903 = vsel %vm1311, %v1902, %v1898
  %v1904 = vlaneseq
  %v1905 = vshrl.u32 %v1904, 7
  %v1906 = vsub.s32 %v1313, %v1905
  %v1907 = vrot.slane %v1164, %v1906
  %v1908 = vsel %vm1318, %v1907, %v1903
  %vm1909 = vcmask 1041409
  %v1910 = vsel %vm1909, %v1338, %v1319
  %vm1911 = vcmask 1042434
  %v1912 = vsel %vm1911, %v1357, %v1910
  %vm1913 = vcmask 1043459
  %v1914 = vsel %vm1913, %v1376, %v1912
  %vm1915 = vcmask 1044484
  %v1916 = vsel %vm1915, %v1395, %v1914
  %vm1917 = vcmask 1045509
  %v1918 = vsel %vm1917, %v1414, %v1916
  %vm1919 = vcmask 1046534
  %v1920 = vsel %vm1919, %v1433, %v1918
  %vm1921 = vcmask 1047559
  %v1922 = vsel %vm1921, %v1452, %v1920
  %v1923 = vsel %vm1909, %v1490, %v1471
  %v1924 = vsel %vm1911, %v1509, %v1923
  %v1925 = vsel %vm1913, %v1528, %v1924
  %v1926 = vsel %vm1915, %v1547, %v1925
  %v1927 = vsel %vm1917, %v1566, %v1926
  %v1928 = vsel %vm1919, %v1585, %v1927
  %v1929 = vsel %vm1921, %v1604, %v1928
  %v1930 = vsel %vm1909, %v1642, %v1623
  %v1931 = vsel %vm1911, %v1661, %v1930
  %v1932 = vsel %vm1913, %v1680, %v1931
  %v1933 = vsel %vm1915, %v1699, %v1932
  %v1934 = vsel %vm1917, %v1718, %v1933
  %v1935 = vsel %vm1919, %v1737, %v1934
  %v1936 = vsel %vm1921, %v1756, %v1935
  %v1937 = vsel %vm1909, %v1794, %v1775
  %v1938 = vsel %vm1911, %v1813, %v1937
  %v1939 = vsel %vm1913, %v1832, %v1938
  %v1940 = vsel %vm1915, %v1851, %v1939
  %v1941 = vsel %vm1917, %v1870, %v1940
  %v1942 = vsel %vm1919, %v1889, %v1941
  %v1943 = vsel %vm1921, %v1908, %v1942
  %vm1948 = vcmask 261120
  %v1949 = vsel %vm1948, %v1922, 0.0
  %1950 = vadd.xlane.f32.xlu0 %v1949
  %v1951 = vpop.xlane.xlu0 %1950
  %v1952 = vsel %vm1948, %v1929, 0.0
  %1953 = vadd.xlane.f32.xlu0 %v1952
  %v1954 = vpop.xlane.xlu0 %1953
  %v1955 = vsel %vm1948, %v1936, 0.0
  %1956 = vadd.xlane.f32.xlu0 %v1955
  %v1957 = vpop.xlane.xlu0 %1956
  %v1958 = vsel %vm1948, %v1943, 0.0
  %1959 = vadd.xlane.f32.xlu0 %v1958
  %v1960 = vpop.xlane.xlu0 %1959
  %vm1961 = vcmask 7168
  %1962 = vst.msk [vmem:[#allocation2] sm:$0xff] %vm1961, %v1951
  %1963 = vst.msk [vmem:[#allocation2 + $0x8] sm:$0xff] %vm1961, %v1954
  %1964 = vst.msk [vmem:[#allocation2 + $0x10] sm:$0xff] %vm1961, %v1957
  %1965 = vst.msk [vmem:[#allocation2 + $0x18] sm:$0xff] %vm1961, %v1960
  %v1966 = vmul.f32 %v269, %v255
  %v1967 = vmul.f32 %v270, %v256
  %v1968 = vmul.f32 %v271, %v259
  %v1969 = vmul.f32 %v272, %v260
  %v1970 = vmul.f32 %v273, %v263
  %v1971 = vmul.f32 %v274, %v264
  %v1972 = vmul.f32 %v275, %v267
  %v1973 = vmul.f32 %v276, %v268
  %v1974 = vmul.f32 %v277, %v255
  %v1975 = vmul.f32 %v278, %v256
  %v1976 = vmul.f32 %v279, %v259
  %v1977 = vmul.f32 %v280, %v260
  %v1978 = vmul.f32 %v281, %v263
  %v1979 = vmul.f32 %v282, %v264
  %v1980 = vmul.f32 %v283, %v267
  %v1981 = vmul.f32 %v284, %v268
  %v1982 = vmul.f32 %v285, %v255
  %v1983 = vmul.f32 %v286, %v256
  %v1984 = vmul.f32 %v287, %v259
  %v1985 = vmul.f32 %v288, %v260
  %v1986 = vmul.f32 %v289, %v263
  %v1987 = vmul.f32 %v290, %v264
  %v1988 = vmul.f32 %v291, %v267
  %v1989 = vmul.f32 %v292, %v268
  %v1990 = vmul.f32 %v293, %v255
  %v1991 = vmul.f32 %v294, %v256
  %v1992 = vmul.f32 %v295, %v259
  %v1993 = vmul.f32 %v296, %v260
  %v1994 = vmul.f32 %v297, %v263
  %v1995 = vmul.f32 %v298, %v264
  %v1996 = vmul.f32 %v299, %v267
  %v1997 = vmul.f32 %v300, %v268
  %v1998 = vmul.f32 %v301, %v255
  %v1999 = vmul.f32 %v302, %v256
  %v2000 = vmul.f32 %v303, %v259
  %v2001 = vmul.f32 %v304, %v260
  %v2002 = vmul.f32 %v305, %v263
  %v2003 = vmul.f32 %v306, %v264
  %v2004 = vmul.f32 %v307, %v267
  %v2005 = vmul.f32 %v308, %v268
  %v2006 = vmul.f32 %v309, %v255
  %v2007 = vmul.f32 %v310, %v256
  %v2008 = vmul.f32 %v311, %v259
  %v2009 = vmul.f32 %v312, %v260
  %v2010 = vmul.f32 %v313, %v263
  %v2011 = vmul.f32 %v314, %v264
  %v2012 = vmul.f32 %v315, %v267
  %v2013 = vmul.f32 %v316, %v268
  %v2014 = vmul.f32 %v317, %v255
  %v2015 = vmul.f32 %v318, %v256
  %v2016 = vmul.f32 %v319, %v259
  %v2017 = vmul.f32 %v320, %v260
  %v2018 = vmul.f32 %v321, %v263
  %v2019 = vmul.f32 %v322, %v264
  %v2020 = vmul.f32 %v323, %v267
  %v2021 = vmul.f32 %v324, %v268
  %v2022 = vmul.f32 %v325, %v255
  %v2023 = vmul.f32 %v326, %v256
  %v2024 = vmul.f32 %v327, %v259
  %v2025 = vmul.f32 %v328, %v260
  %v2026 = vmul.f32 %v329, %v263
  %v2027 = vmul.f32 %v330, %v264
  %v2028 = vmul.f32 %v331, %v267
  %v2029 = vmul.f32 %v332, %v268
  %v2030 = vmul.f32 %v333, %v255
  %v2031 = vmul.f32 %v334, %v256
  %v2032 = vmul.f32 %v335, %v259
  %v2033 = vmul.f32 %v336, %v260
  %v2034 = vmul.f32 %v337, %v263
  %v2035 = vmul.f32 %v338, %v264
  %v2036 = vmul.f32 %v339, %v267
  %v2037 = vmul.f32 %v340, %v268
  %v2038 = vmul.f32 %v341, %v255
  %v2039 = vmul.f32 %v342, %v256
  %v2040 = vmul.f32 %v343, %v259
  %v2041 = vmul.f32 %v344, %v260
  %v2042 = vmul.f32 %v345, %v263
  %v2043 = vmul.f32 %v346, %v264
  %v2044 = vmul.f32 %v347, %v267
  %v2045 = vmul.f32 %v348, %v268
  %v2046 = vmul.f32 %v349, %v255
  %v2047 = vmul.f32 %v350, %v256
  %v2048 = vmul.f32 %v351, %v259
  %v2049 = vmul.f32 %v352, %v260
  %v2050 = vmul.f32 %v353, %v263
  %v2051 = vmul.f32 %v354, %v264
  %v2052 = vmul.f32 %v355, %v267
  %v2053 = vmul.f32 %v356, %v268
  %v2054 = vmul.f32 %v357, %v255
  %v2055 = vmul.f32 %v358, %v256
  %v2056 = vmul.f32 %v359, %v259
  %v2057 = vmul.f32 %v360, %v260
  %v2058 = vmul.f32 %v361, %v263
  %v2059 = vmul.f32 %v362, %v264
  %v2060 = vmul.f32 %v363, %v267
  %v2061 = vmul.f32 %v364, %v268
  %v2062 = vmul.f32 %v365, %v255
  %v2063 = vmul.f32 %v366, %v256
  %v2064 = vmul.f32 %v367, %v259
  %v2065 = vmul.f32 %v368, %v260
  %v2066 = vmul.f32 %v369, %v263
  %v2067 = vmul.f32 %v370, %v264
  %v2068 = vmul.f32 %v371, %v267
  %v2069 = vmul.f32 %v372, %v268
  %v2070 = vmul.f32 %v373, %v255
  %v2071 = vmul.f32 %v374, %v256
  %v2072 = vmul.f32 %v375, %v259
  %v2073 = vmul.f32 %v376, %v260
  %v2074 = vmul.f32 %v377, %v263
  %v2075 = vmul.f32 %v378, %v264
  %v2076 = vmul.f32 %v379, %v267
  %v2077 = vmul.f32 %v380, %v268
  %v2078 = vmul.f32 %v381, %v255
  %v2079 = vmul.f32 %v382, %v256
  %v2080 = vmul.f32 %v383, %v259
  %v2081 = vmul.f32 %v384, %v260
  %v2082 = vmul.f32 %v385, %v263
  %v2083 = vmul.f32 %v386, %v264
  %v2084 = vmul.f32 %v387, %v267
  %v2085 = vmul.f32 %v388, %v268
  %v2086 = vmul.f32 %v389, %v255
  %v2087 = vmul.f32 %v390, %v256
  %v2088 = vmul.f32 %v391, %v259
  %v2089 = vmul.f32 %v392, %v260
  %v2090 = vmul.f32 %v393, %v263
  %v2091 = vmul.f32 %v394, %v264
  %v2092 = vmul.f32 %v395, %v267
  %v2093 = vmul.f32 %v396, %v268
  %v2094 = vmul.f32 %v397, %v255
  %v2095 = vmul.f32 %v398, %v256
  %v2096 = vmul.f32 %v399, %v259
  %v2097 = vmul.f32 %v400, %v260
  %v2098 = vmul.f32 %v401, %v263
  %v2099 = vmul.f32 %v402, %v264
  %v2100 = vmul.f32 %v403, %v267
  %v2101 = vmul.f32 %v404, %v268
  %v2102 = vmul.f32 %v405, %v255
  %v2103 = vmul.f32 %v406, %v256
  %v2104 = vmul.f32 %v407, %v259
  %v2105 = vmul.f32 %v408, %v260
  %v2106 = vmul.f32 %v409, %v263
  %v2107 = vmul.f32 %v410, %v264
  %v2108 = vmul.f32 %v411, %v267
  %v2109 = vmul.f32 %v412, %v268
  %v2110 = vmul.f32 %v413, %v255
  %v2111 = vmul.f32 %v414, %v256
  %v2112 = vmul.f32 %v415, %v259
  %v2113 = vmul.f32 %v416, %v260
  %v2114 = vmul.f32 %v417, %v263
  %v2115 = vmul.f32 %v418, %v264
  %v2116 = vmul.f32 %v419, %v267
  %v2117 = vmul.f32 %v420, %v268
  %v2118 = vmul.f32 %v421, %v255
  %v2119 = vmul.f32 %v422, %v256
  %v2120 = vmul.f32 %v423, %v259
  %v2121 = vmul.f32 %v424, %v260
  %v2122 = vmul.f32 %v425, %v263
  %v2123 = vmul.f32 %v426, %v264
  %v2124 = vmul.f32 %v427, %v267
  %v2125 = vmul.f32 %v428, %v268
  %v2126 = vmul.f32 %v429, %v255
  %v2127 = vmul.f32 %v430, %v256
  %v2128 = vmul.f32 %v431, %v259
  %v2129 = vmul.f32 %v432, %v260
  %v2130 = vmul.f32 %v433, %v263
  %v2131 = vmul.f32 %v434, %v264
  %v2132 = vmul.f32 %v435, %v267
  %v2133 = vmul.f32 %v436, %v268
  %v2134 = vmul.f32 %v437, %v255
  %v2135 = vmul.f32 %v438, %v256
  %v2136 = vmul.f32 %v439, %v259
  %v2137 = vmul.f32 %v440, %v260
  %v2138 = vmul.f32 %v441, %v263
  %v2139 = vmul.f32 %v442, %v264
  %v2140 = vmul.f32 %v443, %v267
  %v2141 = vmul.f32 %v444, %v268
  %v2142 = vmul.f32 %v445, %v255
  %v2143 = vmul.f32 %v446, %v256
  %v2144 = vmul.f32 %v447, %v259
  %v2145 = vmul.f32 %v448, %v260
  %v2146 = vmul.f32 %v449, %v263
  %v2147 = vmul.f32 %v450, %v264
  %v2148 = vmul.f32 %v451, %v267
  %v2149 = vmul.f32 %v452, %v268
  %v2150 = vmul.f32 %v453, %v255
  %v2151 = vmul.f32 %v454, %v256
  %v2152 = vmul.f32 %v455, %v259
  %v2153 = vmul.f32 %v456, %v260
  %v2154 = vmul.f32 %v457, %v263
  %v2155 = vmul.f32 %v458, %v264
  %v2156 = vmul.f32 %v459, %v267
  %v2157 = vmul.f32 %v460, %v268
  %v2158 = vmul.f32 %v461, %v255
  %v2159 = vmul.f32 %v462, %v256
  %v2160 = vmul.f32 %v463, %v259
  %v2161 = vmul.f32 %v464, %v260
  %v2162 = vmul.f32 %v465, %v263
  %v2163 = vmul.f32 %v466, %v264
  %v2164 = vmul.f32 %v467, %v267
  %v2165 = vmul.f32 %v468, %v268
  %v2166 = vmul.f32 %v469, %v255
  %v2167 = vmul.f32 %v470, %v256
  %v2168 = vmul.f32 %v471, %v259
  %v2169 = vmul.f32 %v472, %v260
  %v2170 = vmul.f32 %v473, %v263
  %v2171 = vmul.f32 %v474, %v264
  %v2172 = vmul.f32 %v475, %v267
  %v2173 = vmul.f32 %v476, %v268
  %v2174 = vmul.f32 %v477, %v255
  %v2175 = vmul.f32 %v478, %v256
  %v2176 = vmul.f32 %v479, %v259
  %v2177 = vmul.f32 %v480, %v260
  %v2178 = vmul.f32 %v481, %v263
  %v2179 = vmul.f32 %v482, %v264
  %v2180 = vmul.f32 %v483, %v267
  %v2181 = vmul.f32 %v484, %v268
  %v2182 = vmul.f32 %v485, %v255
  %v2183 = vmul.f32 %v486, %v256
  %v2184 = vmul.f32 %v487, %v259
  %v2185 = vmul.f32 %v488, %v260
  %v2186 = vmul.f32 %v489, %v263
  %v2187 = vmul.f32 %v490, %v264
  %v2188 = vmul.f32 %v491, %v267
  %v2189 = vmul.f32 %v492, %v268
  %v2190 = vmul.f32 %v493, %v255
  %v2191 = vmul.f32 %v494, %v256
  %v2192 = vmul.f32 %v495, %v259
  %v2193 = vmul.f32 %v496, %v260
  %v2194 = vmul.f32 %v497, %v263
  %v2195 = vmul.f32 %v498, %v264
  %v2196 = vmul.f32 %v499, %v267
  %v2197 = vmul.f32 %v500, %v268
  %v2198 = vmul.f32 %v501, %v255
  %v2199 = vmul.f32 %v502, %v256
  %v2200 = vmul.f32 %v503, %v259
  %v2201 = vmul.f32 %v504, %v260
  %v2202 = vmul.f32 %v505, %v263
  %v2203 = vmul.f32 %v506, %v264
  %v2204 = vmul.f32 %v507, %v267
  %v2205 = vmul.f32 %v508, %v268
  %v2206 = vmul.f32 %v509, %v255
  %v2207 = vmul.f32 %v510, %v256
  %v2208 = vmul.f32 %v511, %v259
  %v2209 = vmul.f32 %v512, %v260
  %v2210 = vmul.f32 %v513, %v263
  %v2211 = vmul.f32 %v514, %v264
  %v2212 = vmul.f32 %v515, %v267
  %v2213 = vmul.f32 %v516, %v268
  %v2214 = vmul.f32 %v517, %v255
  %v2215 = vmul.f32 %v518, %v256
  %v2216 = vmul.f32 %v519, %v259
  %v2217 = vmul.f32 %v520, %v260
  %v2218 = vmul.f32 %v521, %v263
  %v2219 = vmul.f32 %v522, %v264
  %v2220 = vmul.f32 %v523, %v267
  %v2221 = vmul.f32 %v524, %v268
  %v2222 = vadd.f32 %v1966, %v1967
  %2223 = vadd.xlane.f32.xlu0 %v2222
  %v2224 = vpop.xlane.xlu0 %2223
  %v2225 = vadd.f32 %v1968, %v1969
  %2226 = vadd.xlane.f32.xlu0 %v2225
  %v2227 = vpop.xlane.xlu0 %2226
  %v2228 = vadd.f32 %v1970, %v1971
  %2229 = vadd.xlane.f32.xlu0 %v2228
  %v2230 = vpop.xlane.xlu0 %2229
  %v2231 = vadd.f32 %v1972, %v1973
  %2232 = vadd.xlane.f32.xlu0 %v2231
  %v2233 = vpop.xlane.xlu0 %2232
  %v2234 = vadd.f32 %v1974, %v1975
  %2235 = vadd.xlane.f32.xlu0 %v2234
  %v2236 = vpop.xlane.xlu0 %2235
  %v2237 = vadd.f32 %v1976, %v1977
  %2238 = vadd.xlane.f32.xlu0 %v2237
  %v2239 = vpop.xlane.xlu0 %2238
  %v2240 = vadd.f32 %v1978, %v1979
  %2241 = vadd.xlane.f32.xlu0 %v2240
  %v2242 = vpop.xlane.xlu0 %2241
  %v2243 = vadd.f32 %v1980, %v1981
  %2244 = vadd.xlane.f32.xlu0 %v2243
  %v2245 = vpop.xlane.xlu0 %2244
  %v2246 = vadd.f32 %v1982, %v1983
  %2247 = vadd.xlane.f32.xlu0 %v2246
  %v2248 = vpop.xlane.xlu0 %2247
  %v2249 = vadd.f32 %v1984, %v1985
  %2250 = vadd.xlane.f32.xlu0 %v2249
  %v2251 = vpop.xlane.xlu0 %2250
  %v2252 = vadd.f32 %v1986, %v1987
  %2253 = vadd.xlane.f32.xlu0 %v2252
  %v2254 = vpop.xlane.xlu0 %2253
  %v2255 = vadd.f32 %v1988, %v1989
  %2256 = vadd.xlane.f32.xlu0 %v2255
  %v2257 = vpop.xlane.xlu0 %2256
  %v2258 = vadd.f32 %v1990, %v1991
  %2259 = vadd.xlane.f32.xlu0 %v2258
  %v2260 = vpop.xlane.xlu0 %2259
  %v2261 = vadd.f32 %v1992, %v1993
  %2262 = vadd.xlane.f32.xlu0 %v2261
  %v2263 = vpop.xlane.xlu0 %2262
  %v2264 = vadd.f32 %v1994, %v1995
  %2265 = vadd.xlane.f32.xlu0 %v2264
  %v2266 = vpop.xlane.xlu0 %2265
  %v2267 = vadd.f32 %v1996, %v1997
  %2268 = vadd.xlane.f32.xlu0 %v2267
  %v2269 = vpop.xlane.xlu0 %2268
  %v2270 = vadd.f32 %v1998, %v1999
  %2271 = vadd.xlane.f32.xlu0 %v2270
  %v2272 = vpop.xlane.xlu0 %2271
  %v2273 = vadd.f32 %v2000, %v2001
  %2274 = vadd.xlane.f32.xlu0 %v2273
  %v2275 = vpop.xlane.xlu0 %2274
  %v2276 = vadd.f32 %v2002, %v2003
  %2277 = vadd.xlane.f32.xlu0 %v2276
  %v2278 = vpop.xlane.xlu0 %2277
  %v2279 = vadd.f32 %v2004, %v2005
  %2280 = vadd.xlane.f32.xlu0 %v2279
  %v2281 = vpop.xlane.xlu0 %2280
  %v2282 = vadd.f32 %v2006, %v2007
  %2283 = vadd.xlane.f32.xlu0 %v2282
  %v2284 = vpop.xlane.xlu0 %2283
  %v2285 = vadd.f32 %v2008, %v2009
  %2286 = vadd.xlane.f32.xlu0 %v2285
  %v2287 = vpop.xlane.xlu0 %2286
  %v2288 = vadd.f32 %v2010, %v2011
  %2289 = vadd.xlane.f32.xlu0 %v2288
  %v2290 = vpop.xlane.xlu0 %2289
  %v2291 = vadd.f32 %v2012, %v2013
  %2292 = vadd.xlane.f32.xlu0 %v2291
  %v2293 = vpop.xlane.xlu0 %2292
  %v2294 = vadd.f32 %v2014, %v2015
  %2295 = vadd.xlane.f32.xlu0 %v2294
  %v2296 = vpop.xlane.xlu0 %2295
  %v2297 = vadd.f32 %v2016, %v2017
  %2298 = vadd.xlane.f32.xlu0 %v2297
  %v2299 = vpop.xlane.xlu0 %2298
  %v2300 = vadd.f32 %v2018, %v2019
  %2301 = vadd.xlane.f32.xlu0 %v2300
  %v2302 = vpop.xlane.xlu0 %2301
  %v2303 = vadd.f32 %v2020, %v2021
  %2304 = vadd.xlane.f32.xlu0 %v2303
  %v2305 = vpop.xlane.xlu0 %2304
  %v2306 = vadd.f32 %v2022, %v2023
  %2307 = vadd.xlane.f32.xlu0 %v2306
  %v2308 = vpop.xlane.xlu0 %2307
  %v2309 = vadd.f32 %v2024, %v2025
  %2310 = vadd.xlane.f32.xlu0 %v2309
  %v2311 = vpop.xlane.xlu0 %2310
  %v2312 = vadd.f32 %v2026, %v2027
  %2313 = vadd.xlane.f32.xlu0 %v2312
  %v2314 = vpop.xlane.xlu0 %2313
  %v2315 = vadd.f32 %v2028, %v2029
  %2316 = vadd.xlane.f32.xlu0 %v2315
  %v2317 = vpop.xlane.xlu0 %2316
  %v2318 = vadd.f32 %v2030, %v2031
  %2319 = vadd.xlane.f32.xlu0 %v2318
  %v2320 = vpop.xlane.xlu0 %2319
  %v2321 = vadd.f32 %v2032, %v2033
  %2322 = vadd.xlane.f32.xlu0 %v2321
  %v2323 = vpop.xlane.xlu0 %2322
  %v2324 = vadd.f32 %v2034, %v2035
  %2325 = vadd.xlane.f32.xlu0 %v2324
  %v2326 = vpop.xlane.xlu0 %2325
  %v2327 = vadd.f32 %v2036, %v2037
  %2328 = vadd.xlane.f32.xlu0 %v2327
  %v2329 = vpop.xlane.xlu0 %2328
  %v2330 = vadd.f32 %v2038, %v2039
  %2331 = vadd.xlane.f32.xlu0 %v2330
  %v2332 = vpop.xlane.xlu0 %2331
  %v2333 = vadd.f32 %v2040, %v2041
  %2334 = vadd.xlane.f32.xlu0 %v2333
  %v2335 = vpop.xlane.xlu0 %2334
  %v2336 = vadd.f32 %v2042, %v2043
  %2337 = vadd.xlane.f32.xlu0 %v2336
  %v2338 = vpop.xlane.xlu0 %2337
  %v2339 = vadd.f32 %v2044, %v2045
  %2340 = vadd.xlane.f32.xlu0 %v2339
  %v2341 = vpop.xlane.xlu0 %2340
  %v2342 = vadd.f32 %v2046, %v2047
  %2343 = vadd.xlane.f32.xlu0 %v2342
  %v2344 = vpop.xlane.xlu0 %2343
  %v2345 = vadd.f32 %v2048, %v2049
  %2346 = vadd.xlane.f32.xlu0 %v2345
  %v2347 = vpop.xlane.xlu0 %2346
  %v2348 = vadd.f32 %v2050, %v2051
  %2349 = vadd.xlane.f32.xlu0 %v2348
  %v2350 = vpop.xlane.xlu0 %2349
  %v2351 = vadd.f32 %v2052, %v2053
  %2352 = vadd.xlane.f32.xlu0 %v2351
  %v2353 = vpop.xlane.xlu0 %2352
  %v2354 = vadd.f32 %v2054, %v2055
  %2355 = vadd.xlane.f32.xlu0 %v2354
  %v2356 = vpop.xlane.xlu0 %2355
  %v2357 = vadd.f32 %v2056, %v2057
  %2358 = vadd.xlane.f32.xlu0 %v2357
  %v2359 = vpop.xlane.xlu0 %2358
  %v2360 = vadd.f32 %v2058, %v2059
  %2361 = vadd.xlane.f32.xlu0 %v2360
  %v2362 = vpop.xlane.xlu0 %2361
  %v2363 = vadd.f32 %v2060, %v2061
  %2364 = vadd.xlane.f32.xlu0 %v2363
  %v2365 = vpop.xlane.xlu0 %2364
  %v2366 = vadd.f32 %v2062, %v2063
  %2367 = vadd.xlane.f32.xlu0 %v2366
  %v2368 = vpop.xlane.xlu0 %2367
  %v2369 = vadd.f32 %v2064, %v2065
  %2370 = vadd.xlane.f32.xlu0 %v2369
  %v2371 = vpop.xlane.xlu0 %2370
  %v2372 = vadd.f32 %v2066, %v2067
  %2373 = vadd.xlane.f32.xlu0 %v2372
  %v2374 = vpop.xlane.xlu0 %2373
  %v2375 = vadd.f32 %v2068, %v2069
  %2376 = vadd.xlane.f32.xlu0 %v2375
  %v2377 = vpop.xlane.xlu0 %2376
  %v2378 = vadd.f32 %v2070, %v2071
  %2379 = vadd.xlane.f32.xlu0 %v2378
  %v2380 = vpop.xlane.xlu0 %2379
  %v2381 = vadd.f32 %v2072, %v2073
  %2382 = vadd.xlane.f32.xlu0 %v2381
  %v2383 = vpop.xlane.xlu0 %2382
  %v2384 = vadd.f32 %v2074, %v2075
  %2385 = vadd.xlane.f32.xlu0 %v2384
  %v2386 = vpop.xlane.xlu0 %2385
  %v2387 = vadd.f32 %v2076, %v2077
  %2388 = vadd.xlane.f32.xlu0 %v2387
  %v2389 = vpop.xlane.xlu0 %2388
  %v2390 = vadd.f32 %v2078, %v2079
  %2391 = vadd.xlane.f32.xlu0 %v2390
  %v2392 = vpop.xlane.xlu0 %2391
  %v2393 = vadd.f32 %v2080, %v2081
  %2394 = vadd.xlane.f32.xlu0 %v2393
  %v2395 = vpop.xlane.xlu0 %2394
  %v2396 = vadd.f32 %v2082, %v2083
  %2397 = vadd.xlane.f32.xlu0 %v2396
  %v2398 = vpop.xlane.xlu0 %2397
  %v2399 = vadd.f32 %v2084, %v2085
  %2400 = vadd.xlane.f32.xlu0 %v2399
  %v2401 = vpop.xlane.xlu0 %2400
  %v2402 = vadd.f32 %v2086, %v2087
  %2403 = vadd.xlane.f32.xlu0 %v2402
  %v2404 = vpop.xlane.xlu0 %2403
  %v2405 = vadd.f32 %v2088, %v2089
  %2406 = vadd.xlane.f32.xlu0 %v2405
  %v2407 = vpop.xlane.xlu0 %2406
  %v2408 = vadd.f32 %v2090, %v2091
  %2409 = vadd.xlane.f32.xlu0 %v2408
  %v2410 = vpop.xlane.xlu0 %2409
  %v2411 = vadd.f32 %v2092, %v2093
  %2412 = vadd.xlane.f32.xlu0 %v2411
  %v2413 = vpop.xlane.xlu0 %2412
  %v2414 = vadd.f32 %v2094, %v2095
  %2415 = vadd.xlane.f32.xlu0 %v2414
  %v2416 = vpop.xlane.xlu0 %2415
  %v2417 = vadd.f32 %v2096, %v2097
  %2418 = vadd.xlane.f32.xlu0 %v2417
  %v2419 = vpop.xlane.xlu0 %2418
  %v2420 = vadd.f32 %v2098, %v2099
  %2421 = vadd.xlane.f32.xlu0 %v2420
  %v2422 = vpop.xlane.xlu0 %2421
  %v2423 = vadd.f32 %v2100, %v2101
  %2424 = vadd.xlane.f32.xlu0 %v2423
  %v2425 = vpop.xlane.xlu0 %2424
  %v2426 = vadd.f32 %v2102, %v2103
  %2427 = vadd.xlane.f32.xlu0 %v2426
  %v2428 = vpop.xlane.xlu0 %2427
  %v2429 = vadd.f32 %v2104, %v2105
  %2430 = vadd.xlane.f32.xlu0 %v2429
  %v2431 = vpop.xlane.xlu0 %2430
  %v2432 = vadd.f32 %v2106, %v2107
  %2433 = vadd.xlane.f32.xlu0 %v2432
  %v2434 = vpop.xlane.xlu0 %2433
  %v2435 = vadd.f32 %v2108, %v2109
  %2436 = vadd.xlane.f32.xlu0 %v2435
  %v2437 = vpop.xlane.xlu0 %2436
  %v2438 = vadd.f32 %v2110, %v2111
  %2439 = vadd.xlane.f32.xlu0 %v2438
  %v2440 = vpop.xlane.xlu0 %2439
  %v2441 = vadd.f32 %v2112, %v2113
  %2442 = vadd.xlane.f32.xlu0 %v2441
  %v2443 = vpop.xlane.xlu0 %2442
  %v2444 = vadd.f32 %v2114, %v2115
  %2445 = vadd.xlane.f32.xlu0 %v2444
  %v2446 = vpop.xlane.xlu0 %2445
  %v2447 = vadd.f32 %v2116, %v2117
  %2448 = vadd.xlane.f32.xlu0 %v2447
  %v2449 = vpop.xlane.xlu0 %2448
  %v2450 = vadd.f32 %v2118, %v2119
  %2451 = vadd.xlane.f32.xlu0 %v2450
  %v2452 = vpop.xlane.xlu0 %2451
  %v2453 = vadd.f32 %v2120, %v2121
  %2454 = vadd.xlane.f32.xlu0 %v2453
  %v2455 = vpop.xlane.xlu0 %2454
  %v2456 = vadd.f32 %v2122, %v2123
  %2457 = vadd.xlane.f32.xlu0 %v2456
  %v2458 = vpop.xlane.xlu0 %2457
  %v2459 = vadd.f32 %v2124, %v2125
  %2460 = vadd.xlane.f32.xlu0 %v2459
  %v2461 = vpop.xlane.xlu0 %2460
  %v2462 = vadd.f32 %v2126, %v2127
  %2463 = vadd.xlane.f32.xlu0 %v2462
  %v2464 = vpop.xlane.xlu0 %2463
  %v2465 = vadd.f32 %v2128, %v2129
  %2466 = vadd.xlane.f32.xlu0 %v2465
  %v2467 = vpop.xlane.xlu0 %2466
  %v2468 = vadd.f32 %v2130, %v2131
  %2469 = vadd.xlane.f32.xlu0 %v2468
  %v2470 = vpop.xlane.xlu0 %2469
  %v2471 = vadd.f32 %v2132, %v2133
  %2472 = vadd.xlane.f32.xlu0 %v2471
  %v2473 = vpop.xlane.xlu0 %2472
  %v2474 = vadd.f32 %v2134, %v2135
  %2475 = vadd.xlane.f32.xlu0 %v2474
  %v2476 = vpop.xlane.xlu0 %2475
  %v2477 = vadd.f32 %v2136, %v2137
  %2478 = vadd.xlane.f32.xlu0 %v2477
  %v2479 = vpop.xlane.xlu0 %2478
  %v2480 = vadd.f32 %v2138, %v2139
  %2481 = vadd.xlane.f32.xlu0 %v2480
  %v2482 = vpop.xlane.xlu0 %2481
  %v2483 = vadd.f32 %v2140, %v2141
  %2484 = vadd.xlane.f32.xlu0 %v2483
  %v2485 = vpop.xlane.xlu0 %2484
  %v2486 = vadd.f32 %v2142, %v2143
  %2487 = vadd.xlane.f32.xlu0 %v2486
  %v2488 = vpop.xlane.xlu0 %2487
  %v2489 = vadd.f32 %v2144, %v2145
  %2490 = vadd.xlane.f32.xlu0 %v2489
  %v2491 = vpop.xlane.xlu0 %2490
  %v2492 = vadd.f32 %v2146, %v2147
  %2493 = vadd.xlane.f32.xlu0 %v2492
  %v2494 = vpop.xlane.xlu0 %2493
  %v2495 = vadd.f32 %v2148, %v2149
  %2496 = vadd.xlane.f32.xlu0 %v2495
  %v2497 = vpop.xlane.xlu0 %2496
  %v2498 = vadd.f32 %v2150, %v2151
  %2499 = vadd.xlane.f32.xlu0 %v2498
  %v2500 = vpop.xlane.xlu0 %2499
  %v2501 = vadd.f32 %v2152, %v2153
  %2502 = vadd.xlane.f32.xlu0 %v2501
  %v2503 = vpop.xlane.xlu0 %2502
  %v2504 = vadd.f32 %v2154, %v2155
  %2505 = vadd.xlane.f32.xlu0 %v2504
  %v2506 = vpop.xlane.xlu0 %2505
  %v2507 = vadd.f32 %v2156, %v2157
  %2508 = vadd.xlane.f32.xlu0 %v2507
  %v2509 = vpop.xlane.xlu0 %2508
  %v2510 = vadd.f32 %v2158, %v2159
  %2511 = vadd.xlane.f32.xlu0 %v2510
  %v2512 = vpop.xlane.xlu0 %2511
  %v2513 = vadd.f32 %v2160, %v2161
  %2514 = vadd.xlane.f32.xlu0 %v2513
  %v2515 = vpop.xlane.xlu0 %2514
  %v2516 = vadd.f32 %v2162, %v2163
  %2517 = vadd.xlane.f32.xlu0 %v2516
  %v2518 = vpop.xlane.xlu0 %2517
  %v2519 = vadd.f32 %v2164, %v2165
  %2520 = vadd.xlane.f32.xlu0 %v2519
  %v2521 = vpop.xlane.xlu0 %2520
  %v2522 = vadd.f32 %v2166, %v2167
  %2523 = vadd.xlane.f32.xlu0 %v2522
  %v2524 = vpop.xlane.xlu0 %2523
  %v2525 = vadd.f32 %v2168, %v2169
  %2526 = vadd.xlane.f32.xlu0 %v2525
  %v2527 = vpop.xlane.xlu0 %2526
  %v2528 = vadd.f32 %v2170, %v2171
  %2529 = vadd.xlane.f32.xlu0 %v2528
  %v2530 = vpop.xlane.xlu0 %2529
  %v2531 = vadd.f32 %v2172, %v2173
  %2532 = vadd.xlane.f32.xlu0 %v2531
  %v2533 = vpop.xlane.xlu0 %2532
  %v2534 = vadd.f32 %v2174, %v2175
  %2535 = vadd.xlane.f32.xlu0 %v2534
  %v2536 = vpop.xlane.xlu0 %2535
  %v2537 = vadd.f32 %v2176, %v2177
  %2538 = vadd.xlane.f32.xlu0 %v2537
  %v2539 = vpop.xlane.xlu0 %2538
  %v2540 = vadd.f32 %v2178, %v2179
  %2541 = vadd.xlane.f32.xlu0 %v2540
  %v2542 = vpop.xlane.xlu0 %2541
  %v2543 = vadd.f32 %v2180, %v2181
  %2544 = vadd.xlane.f32.xlu0 %v2543
  %v2545 = vpop.xlane.xlu0 %2544
  %v2546 = vadd.f32 %v2182, %v2183
  %2547 = vadd.xlane.f32.xlu0 %v2546
  %v2548 = vpop.xlane.xlu0 %2547
  %v2549 = vadd.f32 %v2184, %v2185
  %2550 = vadd.xlane.f32.xlu0 %v2549
  %v2551 = vpop.xlane.xlu0 %2550
  %v2552 = vadd.f32 %v2186, %v2187
  %2553 = vadd.xlane.f32.xlu0 %v2552
  %v2554 = vpop.xlane.xlu0 %2553
  %v2555 = vadd.f32 %v2188, %v2189
  %2556 = vadd.xlane.f32.xlu0 %v2555
  %v2557 = vpop.xlane.xlu0 %2556
  %v2558 = vadd.f32 %v2190, %v2191
  %2559 = vadd.xlane.f32.xlu0 %v2558
  %v2560 = vpop.xlane.xlu0 %2559
  %v2561 = vadd.f32 %v2192, %v2193
  %2562 = vadd.xlane.f32.xlu0 %v2561
  %v2563 = vpop.xlane.xlu0 %2562
  %v2564 = vadd.f32 %v2194, %v2195
  %2565 = vadd.xlane.f32.xlu0 %v2564
  %v2566 = vpop.xlane.xlu0 %2565
  %v2567 = vadd.f32 %v2196, %v2197
  %2568 = vadd.xlane.f32.xlu0 %v2567
  %v2569 = vpop.xlane.xlu0 %2568
  %v2570 = vadd.f32 %v2198, %v2199
  %2571 = vadd.xlane.f32.xlu0 %v2570
  %v2572 = vpop.xlane.xlu0 %2571
  %v2573 = vadd.f32 %v2200, %v2201
  %2574 = vadd.xlane.f32.xlu0 %v2573
  %v2575 = vpop.xlane.xlu0 %2574
  %v2576 = vadd.f32 %v2202, %v2203
  %2577 = vadd.xlane.f32.xlu0 %v2576
  %v2578 = vpop.xlane.xlu0 %2577
  %v2579 = vadd.f32 %v2204, %v2205
  %2580 = vadd.xlane.f32.xlu0 %v2579
  %v2581 = vpop.xlane.xlu0 %2580
  %v2582 = vadd.f32 %v2206, %v2207
  %2583 = vadd.xlane.f32.xlu0 %v2582
  %v2584 = vpop.xlane.xlu0 %2583
  %v2585 = vadd.f32 %v2208, %v2209
  %2586 = vadd.xlane.f32.xlu0 %v2585
  %v2587 = vpop.xlane.xlu0 %2586
  %v2588 = vadd.f32 %v2210, %v2211
  %2589 = vadd.xlane.f32.xlu0 %v2588
  %v2590 = vpop.xlane.xlu0 %2589
  %v2591 = vadd.f32 %v2212, %v2213
  %2592 = vadd.xlane.f32.xlu0 %v2591
  %v2593 = vpop.xlane.xlu0 %2592
  %v2594 = vadd.f32 %v2214, %v2215
  %2595 = vadd.xlane.f32.xlu0 %v2594
  %v2596 = vpop.xlane.xlu0 %2595
  %v2597 = vadd.f32 %v2216, %v2217
  %2598 = vadd.xlane.f32.xlu0 %v2597
  %v2599 = vpop.xlane.xlu0 %2598
  %v2600 = vadd.f32 %v2218, %v2219
  %2601 = vadd.xlane.f32.xlu0 %v2600
  %v2602 = vpop.xlane.xlu0 %2601
  %v2603 = vadd.f32 %v2220, %v2221
  %2604 = vadd.xlane.f32.xlu0 %v2603
  %v2605 = vpop.xlane.xlu0 %2604
  %v2734 = vlaneseq
  %v2735 = vshrl.u32 %v2734, 7
  %v2736 = vsub.s32 %v1294, %v2735
  %v2737 = vrot.slane %v2224, %v2736
  %v2738 = vlaneseq
  %v2739 = vshrl.u32 %v2738, 7
  %v2740 = vsub.s32 %v1299, %v2739
  %v2741 = vrot.slane %v2227, %v2740
  %v2742 = vsel %vm1304, %v2741, %v2737
  %v2743 = vlaneseq
  %v2744 = vshrl.u32 %v2743, 7
  %v2745 = vsub.s32 %v1306, %v2744
  %v2746 = vrot.slane %v2230, %v2745
  %v2747 = vsel %vm1311, %v2746, %v2742
  %v2748 = vlaneseq
  %v2749 = vshrl.u32 %v2748, 7
  %v2750 = vsub.s32 %v1313, %v2749
  %v2751 = vrot.slane %v2233, %v2750
  %v2752 = vsel %vm1318, %v2751, %v2747
  %v2753 = vlaneseq
  %v2754 = vshrl.u32 %v2753, 7
  %v2755 = vsub.s32 %v1294, %v2754
  %v2756 = vrot.slane %v2236, %v2755
  %v2757 = vlaneseq
  %v2758 = vshrl.u32 %v2757, 7
  %v2759 = vsub.s32 %v1299, %v2758
  %v2760 = vrot.slane %v2239, %v2759
  %v2761 = vsel %vm1304, %v2760, %v2756
  %v2762 = vlaneseq
  %v2763 = vshrl.u32 %v2762, 7
  %v2764 = vsub.s32 %v1306, %v2763
  %v2765 = vrot.slane %v2242, %v2764
  %v2766 = vsel %vm1311, %v2765, %v2761
  %v2767 = vlaneseq
  %v2768 = vshrl.u32 %v2767, 7
  %v2769 = vsub.s32 %v1313, %v2768
  %v2770 = vrot.slane %v2245, %v2769
  %v2771 = vsel %vm1318, %v2770, %v2766
  %v2772 = vlaneseq
  %v2773 = vshrl.u32 %v2772, 7
  %v2774 = vsub.s32 %v1294, %v2773
  %v2775 = vrot.slane %v2248, %v2774
  %v2776 = vlaneseq
  %v2777 = vshrl.u32 %v2776, 7
  %v2778 = vsub.s32 %v1299, %v2777
  %v2779 = vrot.slane %v2251, %v2778
  %v2780 = vsel %vm1304, %v2779, %v2775
  %v2781 = vlaneseq
  %v2782 = vshrl.u32 %v2781, 7
  %v2783 = vsub.s32 %v1306, %v2782
  %v2784 = vrot.slane %v2254, %v2783
  %v2785 = vsel %vm1311, %v2784, %v2780
  %v2786 = vlaneseq
  %v2787 = vshrl.u32 %v2786, 7
  %v2788 = vsub.s32 %v1313, %v2787
  %v2789 = vrot.slane %v2257, %v2788
  %v2790 = vsel %vm1318, %v2789, %v2785
  %v2791 = vlaneseq
  %v2792 = vshrl.u32 %v2791, 7
  %v2793 = vsub.s32 %v1294, %v2792
  %v2794 = vrot.slane %v2260, %v2793
  %v2795 = vlaneseq
  %v2796 = vshrl.u32 %v2795, 7
  %v2797 = vsub.s32 %v1299, %v2796
  %v2798 = vrot.slane %v2263, %v2797
  %v2799 = vsel %vm1304, %v2798, %v2794
  %v2800 = vlaneseq
  %v2801 = vshrl.u32 %v2800, 7
  %v2802 = vsub.s32 %v1306, %v2801
  %v2803 = vrot.slane %v2266, %v2802
  %v2804 = vsel %vm1311, %v2803, %v2799
  %v2805 = vlaneseq
  %v2806 = vshrl.u32 %v2805, 7
  %v2807 = vsub.s32 %v1313, %v2806
  %v2808 = vrot.slane %v2269, %v2807
  %v2809 = vsel %vm1318, %v2808, %v2804
  %v2810 = vlaneseq
  %v2811 = vshrl.u32 %v2810, 7
  %v2812 = vsub.s32 %v1294, %v2811
  %v2813 = vrot.slane %v2272, %v2812
  %v2814 = vlaneseq
  %v2815 = vshrl.u32 %v2814, 7
  %v2816 = vsub.s32 %v1299, %v2815
  %v2817 = vrot.slane %v2275, %v2816
  %v2818 = vsel %vm1304, %v2817, %v2813
  %v2819 = vlaneseq
  %v2820 = vshrl.u32 %v2819, 7
  %v2821 = vsub.s32 %v1306, %v2820
  %v2822 = vrot.slane %v2278, %v2821
  %v2823 = vsel %vm1311, %v2822, %v2818
  %v2824 = vlaneseq
  %v2825 = vshrl.u32 %v2824, 7
  %v2826 = vsub.s32 %v1313, %v2825
  %v2827 = vrot.slane %v2281, %v2826
  %v2828 = vsel %vm1318, %v2827, %v2823
  %v2829 = vlaneseq
  %v2830 = vshrl.u32 %v2829, 7
  %v2831 = vsub.s32 %v1294, %v2830
  %v2832 = vrot.slane %v2284, %v2831
  %v2833 = vlaneseq
  %v2834 = vshrl.u32 %v2833, 7
  %v2835 = vsub.s32 %v1299, %v2834
  %v2836 = vrot.slane %v2287, %v2835
  %v2837 = vsel %vm1304, %v2836, %v2832
  %v2838 = vlaneseq
  %v2839 = vshrl.u32 %v2838, 7
  %v2840 = vsub.s32 %v1306, %v2839
  %v2841 = vrot.slane %v2290, %v2840
  %v2842 = vsel %vm1311, %v2841, %v2837
  %v2843 = vlaneseq
  %v2844 = vshrl.u32 %v2843, 7
  %v2845 = vsub.s32 %v1313, %v2844
  %v2846 = vrot.slane %v2293, %v2845
  %v2847 = vsel %vm1318, %v2846, %v2842
  %v2848 = vlaneseq
  %v2849 = vshrl.u32 %v2848, 7
  %v2850 = vsub.s32 %v1294, %v2849
  %v2851 = vrot.slane %v2296, %v2850
  %v2852 = vlaneseq
  %v2853 = vshrl.u32 %v2852, 7
  %v2854 = vsub.s32 %v1299, %v2853
  %v2855 = vrot.slane %v2299, %v2854
  %v2856 = vsel %vm1304, %v2855, %v2851
  %v2857 = vlaneseq
  %v2858 = vshrl.u32 %v2857, 7
  %v2859 = vsub.s32 %v1306, %v2858
  %v2860 = vrot.slane %v2302, %v2859
  %v2861 = vsel %vm1311, %v2860, %v2856
  %v2862 = vlaneseq
  %v2863 = vshrl.u32 %v2862, 7
  %v2864 = vsub.s32 %v1313, %v2863
  %v2865 = vrot.slane %v2305, %v2864
  %v2866 = vsel %vm1318, %v2865, %v2861
  %v2867 = vlaneseq
  %v2868 = vshrl.u32 %v2867, 7
  %v2869 = vsub.s32 %v1294, %v2868
  %v2870 = vrot.slane %v2308, %v2869
  %v2871 = vlaneseq
  %v2872 = vshrl.u32 %v2871, 7
  %v2873 = vsub.s32 %v1299, %v2872
  %v2874 = vrot.slane %v2311, %v2873
  %v2875 = vsel %vm1304, %v2874, %v2870
  %v2876 = vlaneseq
  %v2877 = vshrl.u32 %v2876, 7
  %v2878 = vsub.s32 %v1306, %v2877
  %v2879 = vrot.slane %v2314, %v2878
  %v2880 = vsel %vm1311, %v2879, %v2875
  %v2881 = vlaneseq
  %v2882 = vshrl.u32 %v2881, 7
  %v2883 = vsub.s32 %v1313, %v2882
  %v2884 = vrot.slane %v2317, %v2883
  %v2885 = vsel %vm1318, %v2884, %v2880
  %v2886 = vlaneseq
  %v2887 = vshrl.u32 %v2886, 7
  %v2888 = vsub.s32 %v1294, %v2887
  %v2889 = vrot.slane %v2320, %v2888
  %v2890 = vlaneseq
  %v2891 = vshrl.u32 %v2890, 7
  %v2892 = vsub.s32 %v1299, %v2891
  %v2893 = vrot.slane %v2323, %v2892
  %v2894 = vsel %vm1304, %v2893, %v2889
  %v2895 = vlaneseq
  %v2896 = vshrl.u32 %v2895, 7
  %v2897 = vsub.s32 %v1306, %v2896
  %v2898 = vrot.slane %v2326, %v2897
  %v2899 = vsel %vm1311, %v2898, %v2894
  %v2900 = vlaneseq
  %v2901 = vshrl.u32 %v2900, 7
  %v2902 = vsub.s32 %v1313, %v2901
  %v2903 = vrot.slane %v2329, %v2902
  %v2904 = vsel %vm1318, %v2903, %v2899
  %v2905 = vlaneseq
  %v2906 = vshrl.u32 %v2905, 7
  %v2907 = vsub.s32 %v1294, %v2906
  %v2908 = vrot.slane %v2332, %v2907
  %v2909 = vlaneseq
  %v2910 = vshrl.u32 %v2909, 7
  %v2911 = vsub.s32 %v1299, %v2910
  %v2912 = vrot.slane %v2335, %v2911
  %v2913 = vsel %vm1304, %v2912, %v2908
  %v2914 = vlaneseq
  %v2915 = vshrl.u32 %v2914, 7
  %v2916 = vsub.s32 %v1306, %v2915
  %v2917 = vrot.slane %v2338, %v2916
  %v2918 = vsel %vm1311, %v2917, %v2913
  %v2919 = vlaneseq
  %v2920 = vshrl.u32 %v2919, 7
  %v2921 = vsub.s32 %v1313, %v2920
  %v2922 = vrot.slane %v2341, %v2921
  %v2923 = vsel %vm1318, %v2922, %v2918
  %v2924 = vlaneseq
  %v2925 = vshrl.u32 %v2924, 7
  %v2926 = vsub.s32 %v1294, %v2925
  %v2927 = vrot.slane %v2344, %v2926
  %v2928 = vlaneseq
  %v2929 = vshrl.u32 %v2928, 7
  %v2930 = vsub.s32 %v1299, %v2929
  %v2931 = vrot.slane %v2347, %v2930
  %v2932 = vsel %vm1304, %v2931, %v2927
  %v2933 = vlaneseq
  %v2934 = vshrl.u32 %v2933, 7
  %v2935 = vsub.s32 %v1306, %v2934
  %v2936 = vrot.slane %v2350, %v2935
  %v2937 = vsel %vm1311, %v2936, %v2932
  %v2938 = vlaneseq
  %v2939 = vshrl.u32 %v2938, 7
  %v2940 = vsub.s32 %v1313, %v2939
  %v2941 = vrot.slane %v2353, %v2940
  %v2942 = vsel %vm1318, %v2941, %v2937
  %v2943 = vlaneseq
  %v2944 = vshrl.u32 %v2943, 7
  %v2945 = vsub.s32 %v1294, %v2944
  %v2946 = vrot.slane %v2356, %v2945
  %v2947 = vlaneseq
  %v2948 = vshrl.u32 %v2947, 7
  %v2949 = vsub.s32 %v1299, %v2948
  %v2950 = vrot.slane %v2359, %v2949
  %v2951 = vsel %vm1304, %v2950, %v2946
  %v2952 = vlaneseq
  %v2953 = vshrl.u32 %v2952, 7
  %v2954 = vsub.s32 %v1306, %v2953
  %v2955 = vrot.slane %v2362, %v2954
  %v2956 = vsel %vm1311, %v2955, %v2951
  %v2957 = vlaneseq
  %v2958 = vshrl.u32 %v2957, 7
  %v2959 = vsub.s32 %v1313, %v2958
  %v2960 = vrot.slane %v2365, %v2959
  %v2961 = vsel %vm1318, %v2960, %v2956
  %v2962 = vlaneseq
  %v2963 = vshrl.u32 %v2962, 7
  %v2964 = vsub.s32 %v1294, %v2963
  %v2965 = vrot.slane %v2368, %v2964
  %v2966 = vlaneseq
  %v2967 = vshrl.u32 %v2966, 7
  %v2968 = vsub.s32 %v1299, %v2967
  %v2969 = vrot.slane %v2371, %v2968
  %v2970 = vsel %vm1304, %v2969, %v2965
  %v2971 = vlaneseq
  %v2972 = vshrl.u32 %v2971, 7
  %v2973 = vsub.s32 %v1306, %v2972
  %v2974 = vrot.slane %v2374, %v2973
  %v2975 = vsel %vm1311, %v2974, %v2970
  %v2976 = vlaneseq
  %v2977 = vshrl.u32 %v2976, 7
  %v2978 = vsub.s32 %v1313, %v2977
  %v2979 = vrot.slane %v2377, %v2978
  %v2980 = vsel %vm1318, %v2979, %v2975
  %v2981 = vlaneseq
  %v2982 = vshrl.u32 %v2981, 7
  %v2983 = vsub.s32 %v1294, %v2982
  %v2984 = vrot.slane %v2380, %v2983
  %v2985 = vlaneseq
  %v2986 = vshrl.u32 %v2985, 7
  %v2987 = vsub.s32 %v1299, %v2986
  %v2988 = vrot.slane %v2383, %v2987
  %v2989 = vsel %vm1304, %v2988, %v2984
  %v2990 = vlaneseq
  %v2991 = vshrl.u32 %v2990, 7
  %v2992 = vsub.s32 %v1306, %v2991
  %v2993 = vrot.slane %v2386, %v2992
  %v2994 = vsel %vm1311, %v2993, %v2989
  %v2995 = vlaneseq
  %v2996 = vshrl.u32 %v2995, 7
  %v2997 = vsub.s32 %v1313, %v2996
  %v2998 = vrot.slane %v2389, %v2997
  %v2999 = vsel %vm1318, %v2998, %v2994
  %v3000 = vlaneseq
  %v3001 = vshrl.u32 %v3000, 7
  %v3002 = vsub.s32 %v1294, %v3001
  %v3003 = vrot.slane %v2392, %v3002
  %v3004 = vlaneseq
  %v3005 = vshrl.u32 %v3004, 7
  %v3006 = vsub.s32 %v1299, %v3005
  %v3007 = vrot.slane %v2395, %v3006
  %v3008 = vsel %vm1304, %v3007, %v3003
  %v3009 = vlaneseq
  %v3010 = vshrl.u32 %v3009, 7
  %v3011 = vsub.s32 %v1306, %v3010
  %v3012 = vrot.slane %v2398, %v3011
  %v3013 = vsel %vm1311, %v3012, %v3008
  %v3014 = vlaneseq
  %v3015 = vshrl.u32 %v3014, 7
  %v3016 = vsub.s32 %v1313, %v3015
  %v3017 = vrot.slane %v2401, %v3016
  %v3018 = vsel %vm1318, %v3017, %v3013
  %v3019 = vlaneseq
  %v3020 = vshrl.u32 %v3019, 7
  %v3021 = vsub.s32 %v1294, %v3020
  %v3022 = vrot.slane %v2404, %v3021
  %v3023 = vlaneseq
  %v3024 = vshrl.u32 %v3023, 7
  %v3025 = vsub.s32 %v1299, %v3024
  %v3026 = vrot.slane %v2407, %v3025
  %v3027 = vsel %vm1304, %v3026, %v3022
  %v3028 = vlaneseq
  %v3029 = vshrl.u32 %v3028, 7
  %v3030 = vsub.s32 %v1306, %v3029
  %v3031 = vrot.slane %v2410, %v3030
  %v3032 = vsel %vm1311, %v3031, %v3027
  %v3033 = vlaneseq
  %v3034 = vshrl.u32 %v3033, 7
  %v3035 = vsub.s32 %v1313, %v3034
  %v3036 = vrot.slane %v2413, %v3035
  %v3037 = vsel %vm1318, %v3036, %v3032
  %v3038 = vlaneseq
  %v3039 = vshrl.u32 %v3038, 7
  %v3040 = vsub.s32 %v1294, %v3039
  %v3041 = vrot.slane %v2416, %v3040
  %v3042 = vlaneseq
  %v3043 = vshrl.u32 %v3042, 7
  %v3044 = vsub.s32 %v1299, %v3043
  %v3045 = vrot.slane %v2419, %v3044
  %v3046 = vsel %vm1304, %v3045, %v3041
  %v3047 = vlaneseq
  %v3048 = vshrl.u32 %v3047, 7
  %v3049 = vsub.s32 %v1306, %v3048
  %v3050 = vrot.slane %v2422, %v3049
  %v3051 = vsel %vm1311, %v3050, %v3046
  %v3052 = vlaneseq
  %v3053 = vshrl.u32 %v3052, 7
  %v3054 = vsub.s32 %v1313, %v3053
  %v3055 = vrot.slane %v2425, %v3054
  %v3056 = vsel %vm1318, %v3055, %v3051
  %v3057 = vlaneseq
  %v3058 = vshrl.u32 %v3057, 7
  %v3059 = vsub.s32 %v1294, %v3058
  %v3060 = vrot.slane %v2428, %v3059
  %v3061 = vlaneseq
  %v3062 = vshrl.u32 %v3061, 7
  %v3063 = vsub.s32 %v1299, %v3062
  %v3064 = vrot.slane %v2431, %v3063
  %v3065 = vsel %vm1304, %v3064, %v3060
  %v3066 = vlaneseq
  %v3067 = vshrl.u32 %v3066, 7
  %v3068 = vsub.s32 %v1306, %v3067
  %v3069 = vrot.slane %v2434, %v3068
  %v3070 = vsel %vm1311, %v3069, %v3065
  %v3071 = vlaneseq
  %v3072 = vshrl.u32 %v3071, 7
  %v3073 = vsub.s32 %v1313, %v3072
  %v3074 = vrot.slane %v2437, %v3073
  %v3075 = vsel %vm1318, %v3074, %v3070
  %v3076 = vlaneseq
  %v3077 = vshrl.u32 %v3076, 7
  %v3078 = vsub.s32 %v1294, %v3077
  %v3079 = vrot.slane %v2440, %v3078
  %v3080 = vlaneseq
  %v3081 = vshrl.u32 %v3080, 7
  %v3082 = vsub.s32 %v1299, %v3081
  %v3083 = vrot.slane %v2443, %v3082
  %v3084 = vsel %vm1304, %v3083, %v3079
  %v3085 = vlaneseq
  %v3086 = vshrl.u32 %v3085, 7
  %v3087 = vsub.s32 %v1306, %v3086
  %v3088 = vrot.slane %v2446, %v3087
  %v3089 = vsel %vm1311, %v3088, %v3084
  %v3090 = vlaneseq
  %v3091 = vshrl.u32 %v3090, 7
  %v3092 = vsub.s32 %v1313, %v3091
  %v3093 = vrot.slane %v2449, %v3092
  %v3094 = vsel %vm1318, %v3093, %v3089
  %v3095 = vlaneseq
  %v3096 = vshrl.u32 %v3095, 7
  %v3097 = vsub.s32 %v1294, %v3096
  %v3098 = vrot.slane %v2452, %v3097
  %v3099 = vlaneseq
  %v3100 = vshrl.u32 %v3099, 7
  %v3101 = vsub.s32 %v1299, %v3100
  %v3102 = vrot.slane %v2455, %v3101
  %v3103 = vsel %vm1304, %v3102, %v3098
  %v3104 = vlaneseq
  %v3105 = vshrl.u32 %v3104, 7
  %v3106 = vsub.s32 %v1306, %v3105
  %v3107 = vrot.slane %v2458, %v3106
  %v3108 = vsel %vm1311, %v3107, %v3103
  %v3109 = vlaneseq
  %v3110 = vshrl.u32 %v3109, 7
  %v3111 = vsub.s32 %v1313, %v3110
  %v3112 = vrot.slane %v2461, %v3111
  %v3113 = vsel %vm1318, %v3112, %v3108
  %v3114 = vlaneseq
  %v3115 = vshrl.u32 %v3114, 7
  %v3116 = vsub.s32 %v1294, %v3115
  %v3117 = vrot.slane %v2464, %v3116
  %v3118 = vlaneseq
  %v3119 = vshrl.u32 %v3118, 7
  %v3120 = vsub.s32 %v1299, %v3119
  %v3121 = vrot.slane %v2467, %v3120
  %v3122 = vsel %vm1304, %v3121, %v3117
  %v3123 = vlaneseq
  %v3124 = vshrl.u32 %v3123, 7
  %v3125 = vsub.s32 %v1306, %v3124
  %v3126 = vrot.slane %v2470, %v3125
  %v3127 = vsel %vm1311, %v3126, %v3122
  %v3128 = vlaneseq
  %v3129 = vshrl.u32 %v3128, 7
  %v3130 = vsub.s32 %v1313, %v3129
  %v3131 = vrot.slane %v2473, %v3130
  %v3132 = vsel %vm1318, %v3131, %v3127
  %v3133 = vlaneseq
  %v3134 = vshrl.u32 %v3133, 7
  %v3135 = vsub.s32 %v1294, %v3134
  %v3136 = vrot.slane %v2476, %v3135
  %v3137 = vlaneseq
  %v3138 = vshrl.u32 %v3137, 7
  %v3139 = vsub.s32 %v1299, %v3138
  %v3140 = vrot.slane %v2479, %v3139
  %v3141 = vsel %vm1304, %v3140, %v3136
  %v3142 = vlaneseq
  %v3143 = vshrl.u32 %v3142, 7
  %v3144 = vsub.s32 %v1306, %v3143
  %v3145 = vrot.slane %v2482, %v3144
  %v3146 = vsel %vm1311, %v3145, %v3141
  %v3147 = vlaneseq
  %v3148 = vshrl.u32 %v3147, 7
  %v3149 = vsub.s32 %v1313, %v3148
  %v3150 = vrot.slane %v2485, %v3149
  %v3151 = vsel %vm1318, %v3150, %v3146
  %v3152 = vlaneseq
  %v3153 = vshrl.u32 %v3152, 7
  %v3154 = vsub.s32 %v1294, %v3153
  %v3155 = vrot.slane %v2488, %v3154
  %v3156 = vlaneseq
  %v3157 = vshrl.u32 %v3156, 7
  %v3158 = vsub.s32 %v1299, %v3157
  %v3159 = vrot.slane %v2491, %v3158
  %v3160 = vsel %vm1304, %v3159, %v3155
  %v3161 = vlaneseq
  %v3162 = vshrl.u32 %v3161, 7
  %v3163 = vsub.s32 %v1306, %v3162
  %v3164 = vrot.slane %v2494, %v3163
  %v3165 = vsel %vm1311, %v3164, %v3160
  %v3166 = vlaneseq
  %v3167 = vshrl.u32 %v3166, 7
  %v3168 = vsub.s32 %v1313, %v3167
  %v3169 = vrot.slane %v2497, %v3168
  %v3170 = vsel %vm1318, %v3169, %v3165
  %v3171 = vlaneseq
  %v3172 = vshrl.u32 %v3171, 7
  %v3173 = vsub.s32 %v1294, %v3172
  %v3174 = vrot.slane %v2500, %v3173
  %v3175 = vlaneseq
  %v3176 = vshrl.u32 %v3175, 7
  %v3177 = vsub.s32 %v1299, %v3176
  %v3178 = vrot.slane %v2503, %v3177
  %v3179 = vsel %vm1304, %v3178, %v3174
  %v3180 = vlaneseq
  %v3181 = vshrl.u32 %v3180, 7
  %v3182 = vsub.s32 %v1306, %v3181
  %v3183 = vrot.slane %v2506, %v3182
  %v3184 = vsel %vm1311, %v3183, %v3179
  %v3185 = vlaneseq
  %v3186 = vshrl.u32 %v3185, 7
  %v3187 = vsub.s32 %v1313, %v3186
  %v3188 = vrot.slane %v2509, %v3187
  %v3189 = vsel %vm1318, %v3188, %v3184
  %v3190 = vlaneseq
  %v3191 = vshrl.u32 %v3190, 7
  %v3192 = vsub.s32 %v1294, %v3191
  %v3193 = vrot.slane %v2512, %v3192
  %v3194 = vlaneseq
  %v3195 = vshrl.u32 %v3194, 7
  %v3196 = vsub.s32 %v1299, %v3195
  %v3197 = vrot.slane %v2515, %v3196
  %v3198 = vsel %vm1304, %v3197, %v3193
  %v3199 = vlaneseq
  %v3200 = vshrl.u32 %v3199, 7
  %v3201 = vsub.s32 %v1306, %v3200
  %v3202 = vrot.slane %v2518, %v3201
  %v3203 = vsel %vm1311, %v3202, %v3198
  %v3204 = vlaneseq
  %v3205 = vshrl.u32 %v3204, 7
  %v3206 = vsub.s32 %v1313, %v3205
  %v3207 = vrot.slane %v2521, %v3206
  %v3208 = vsel %vm1318, %v3207, %v3203
  %v3209 = vlaneseq
  %v3210 = vshrl.u32 %v3209, 7
  %v3211 = vsub.s32 %v1294, %v3210
  %v3212 = vrot.slane %v2524, %v3211
  %v3213 = vlaneseq
  %v3214 = vshrl.u32 %v3213, 7
  %v3215 = vsub.s32 %v1299, %v3214
  %v3216 = vrot.slane %v2527, %v3215
  %v3217 = vsel %vm1304, %v3216, %v3212
  %v3218 = vlaneseq
  %v3219 = vshrl.u32 %v3218, 7
  %v3220 = vsub.s32 %v1306, %v3219
  %v3221 = vrot.slane %v2530, %v3220
  %v3222 = vsel %vm1311, %v3221, %v3217
  %v3223 = vlaneseq
  %v3224 = vshrl.u32 %v3223, 7
  %v3225 = vsub.s32 %v1313, %v3224
  %v3226 = vrot.slane %v2533, %v3225
  %v3227 = vsel %vm1318, %v3226, %v3222
  %v3228 = vlaneseq
  %v3229 = vshrl.u32 %v3228, 7
  %v3230 = vsub.s32 %v1294, %v3229
  %v3231 = vrot.slane %v2536, %v3230
  %v3232 = vlaneseq
  %v3233 = vshrl.u32 %v3232, 7
  %v3234 = vsub.s32 %v1299, %v3233
  %v3235 = vrot.slane %v2539, %v3234
  %v3236 = vsel %vm1304, %v3235, %v3231
  %v3237 = vlaneseq
  %v3238 = vshrl.u32 %v3237, 7
  %v3239 = vsub.s32 %v1306, %v3238
  %v3240 = vrot.slane %v2542, %v3239
  %v3241 = vsel %vm1311, %v3240, %v3236
  %v3242 = vlaneseq
  %v3243 = vshrl.u32 %v3242, 7
  %v3244 = vsub.s32 %v1313, %v3243
  %v3245 = vrot.slane %v2545, %v3244
  %v3246 = vsel %vm1318, %v3245, %v3241
  %v3247 = vlaneseq
  %v3248 = vshrl.u32 %v3247, 7
  %v3249 = vsub.s32 %v1294, %v3248
  %v3250 = vrot.slane %v2548, %v3249
  %v3251 = vlaneseq
  %v3252 = vshrl.u32 %v3251, 7
  %v3253 = vsub.s32 %v1299, %v3252
  %v3254 = vrot.slane %v2551, %v3253
  %v3255 = vsel %vm1304, %v3254, %v3250
  %v3256 = vlaneseq
  %v3257 = vshrl.u32 %v3256, 7
  %v3258 = vsub.s32 %v1306, %v3257
  %v3259 = vrot.slane %v2554, %v3258
  %v3260 = vsel %vm1311, %v3259, %v3255
  %v3261 = vlaneseq
  %v3262 = vshrl.u32 %v3261, 7
  %v3263 = vsub.s32 %v1313, %v3262
  %v3264 = vrot.slane %v2557, %v3263
  %v3265 = vsel %vm1318, %v3264, %v3260
  %v3266 = vlaneseq
  %v3267 = vshrl.u32 %v3266, 7
  %v3268 = vsub.s32 %v1294, %v3267
  %v3269 = vrot.slane %v2560, %v3268
  %v3270 = vlaneseq
  %v3271 = vshrl.u32 %v3270, 7
  %v3272 = vsub.s32 %v1299, %v3271
  %v3273 = vrot.slane %v2563, %v3272
  %v3274 = vsel %vm1304, %v3273, %v3269
  %v3275 = vlaneseq
  %v3276 = vshrl.u32 %v3275, 7
  %v3277 = vsub.s32 %v1306, %v3276
  %v3278 = vrot.slane %v2566, %v3277
  %v3279 = vsel %vm1311, %v3278, %v3274
  %v3280 = vlaneseq
  %v3281 = vshrl.u32 %v3280, 7
  %v3282 = vsub.s32 %v1313, %v3281
  %v3283 = vrot.slane %v2569, %v3282
  %v3284 = vsel %vm1318, %v3283, %v3279
  %v3285 = vlaneseq
  %v3286 = vshrl.u32 %v3285, 7
  %v3287 = vsub.s32 %v1294, %v3286
  %v3288 = vrot.slane %v2572, %v3287
  %v3289 = vlaneseq
  %v3290 = vshrl.u32 %v3289, 7
  %v3291 = vsub.s32 %v1299, %v3290
  %v3292 = vrot.slane %v2575, %v3291
  %v3293 = vsel %vm1304, %v3292, %v3288
  %v3294 = vlaneseq
  %v3295 = vshrl.u32 %v3294, 7
  %v3296 = vsub.s32 %v1306, %v3295
  %v3297 = vrot.slane %v2578, %v3296
  %v3298 = vsel %vm1311, %v3297, %v3293
  %v3299 = vlaneseq
  %v3300 = vshrl.u32 %v3299, 7
  %v3301 = vsub.s32 %v1313, %v3300
  %v3302 = vrot.slane %v2581, %v3301
  %v3303 = vsel %vm1318, %v3302, %v3298
  %v3304 = vlaneseq
  %v3305 = vshrl.u32 %v3304, 7
  %v3306 = vsub.s32 %v1294, %v3305
  %v3307 = vrot.slane %v2584, %v3306
  %v3308 = vlaneseq
  %v3309 = vshrl.u32 %v3308, 7
  %v3310 = vsub.s32 %v1299, %v3309
  %v3311 = vrot.slane %v2587, %v3310
  %v3312 = vsel %vm1304, %v3311, %v3307
  %v3313 = vlaneseq
  %v3314 = vshrl.u32 %v3313, 7
  %v3315 = vsub.s32 %v1306, %v3314
  %v3316 = vrot.slane %v2590, %v3315
  %v3317 = vsel %vm1311, %v3316, %v3312
  %v3318 = vlaneseq
  %v3319 = vshrl.u32 %v3318, 7
  %v3320 = vsub.s32 %v1313, %v3319
  %v3321 = vrot.slane %v2593, %v3320
  %v3322 = vsel %vm1318, %v3321, %v3317
  %v3323 = vlaneseq
  %v3324 = vshrl.u32 %v3323, 7
  %v3325 = vsub.s32 %v1294, %v3324
  %v3326 = vrot.slane %v2596, %v3325
  %v3327 = vlaneseq
  %v3328 = vshrl.u32 %v3327, 7
  %v3329 = vsub.s32 %v1299, %v3328
  %v3330 = vrot.slane %v2599, %v3329
  %v3331 = vsel %vm1304, %v3330, %v3326
  %v3332 = vlaneseq
  %v3333 = vshrl.u32 %v3332, 7
  %v3334 = vsub.s32 %v1306, %v3333
  %v3335 = vrot.slane %v2602, %v3334
  %v3336 = vsel %vm1311, %v3335, %v3331
  %v3337 = vlaneseq
  %v3338 = vshrl.u32 %v3337, 7
  %v3339 = vsub.s32 %v1313, %v3338
  %v3340 = vrot.slane %v2605, %v3339
  %v3341 = vsel %vm1318, %v3340, %v3336
  %v3342 = vsel %vm1909, %v2771, %v2752
  %v3343 = vsel %vm1911, %v2790, %v3342
  %v3344 = vsel %vm1913, %v2809, %v3343
  %v3345 = vsel %vm1915, %v2828, %v3344
  %v3346 = vsel %vm1917, %v2847, %v3345
  %v3347 = vsel %vm1919, %v2866, %v3346
  %v3348 = vsel %vm1921, %v2885, %v3347
  %v3349 = vsel %vm1909, %v2923, %v2904
  %v3350 = vsel %vm1911, %v2942, %v3349
  %v3351 = vsel %vm1913, %v2961, %v3350
  %v3352 = vsel %vm1915, %v2980, %v3351
  %v3353 = vsel %vm1917, %v2999, %v3352
  %v3354 = vsel %vm1919, %v3018, %v3353
  %v3355 = vsel %vm1921, %v3037, %v3354
  %v3356 = vsel %vm1909, %v3075, %v3056
  %v3357 = vsel %vm1911, %v3094, %v3356
  %v3358 = vsel %vm1913, %v3113, %v3357
  %v3359 = vsel %vm1915, %v3132, %v3358
  %v3360 = vsel %vm1917, %v3151, %v3359
  %v3361 = vsel %vm1919, %v3170, %v3360
  %v3362 = vsel %vm1921, %v3189, %v3361
  %v3363 = vsel %vm1909, %v3227, %v3208
  %v3364 = vsel %vm1911, %v3246, %v3363
  %v3365 = vsel %vm1913, %v3265, %v3364
  %v3366 = vsel %vm1915, %v3284, %v3365
  %v3367 = vsel %vm1917, %v3303, %v3366
  %v3368 = vsel %vm1919, %v3322, %v3367
  %v3369 = vsel %vm1921, %v3341, %v3368
  %v3374 = vsel %vm1948, %v3348, 0.0
  %3375 = vadd.xlane.f32.xlu0 %v3374
  %v3376 = vpop.xlane.xlu0 %3375
  %v3377 = vsel %vm1948, %v3355, 0.0
  %3378 = vadd.xlane.f32.xlu0 %v3377
  %v3379 = vpop.xlane.xlu0 %3378
  %v3380 = vsel %vm1948, %v3362, 0.0
  %3381 = vadd.xlane.f32.xlu0 %v3380
  %v3382 = vpop.xlane.xlu0 %3381
  %v3383 = vsel %vm1948, %v3369, 0.0
  %3384 = vadd.xlane.f32.xlu0 %v3383
  %v3385 = vpop.xlane.xlu0 %3384
  %vm3386 = vcmask 15368
  %3387 = vst.msk [vmem:[#allocation2] sm:$0xff] %vm3386, %v3376
  %3388 = vst.msk [vmem:[#allocation2 + $0x8] sm:$0xff] %vm3386, %v3379
  %3389 = vst.msk [vmem:[#allocation2 + $0x10] sm:$0xff] %vm3386, %v3382
  %3390 = vst.msk [vmem:[#allocation2 + $0x18] sm:$0xff] %vm3386, %v3385
  %v3391 = vld [vmem:[#allocation2] sm:$0xff]
  %v3392 = vld [vmem:[#allocation2 + $0x8] sm:$0xff]
  %v3393 = vld [vmem:[#allocation2 + $0x10] sm:$0xff]
  %v3394 = vld [vmem:[#allocation2 + $0x18] sm:$0xff]
  %v3395 = vld [vmem:[%s4] sm:$0xff]
  %v3396 = vld [vmem:[%s4 + $0x8] sm:$0xff]
  %v3397 = vld [vmem:[%s4 + $0x10] sm:$0xff]
  %v3398 = vld [vmem:[%s4 + $0x18] sm:$0xff]
  %3400 = vset.pattern.permute.xlu0 0
  %3401 = vperm.xlu0 %3400, %v3395
  %v3402 = vpop.permute.xlu0 %3401
  %3405 = vset.pattern.permute.xlu0 0
  %3406 = vperm.xlu0 %3405, %v3396
  %v3407 = vpop.permute.xlu0 %3406
  %3410 = vset.pattern.permute.xlu0 0
  %3411 = vperm.xlu0 %3410, %v3397
  %v3412 = vpop.permute.xlu0 %3411
  %3415 = vset.pattern.permute.xlu0 0
  %3416 = vperm.xlu0 %3415, %v3398
  %v3417 = vpop.permute.xlu0 %3416
  %v3419 = vadd.f32 %v3391, %v3402
  %v3420 = vadd.f32 %v3392, %v3407
  %v3421 = vadd.f32 %v3393, %v3412
  %v3422 = vadd.f32 %v3394, %v3417
  %v3423 = vmax.f32 %v3419, 0.0
  %v3424 = vmax.f32 %v3420, 0.0
  %v3425 = vmax.f32 %v3421, 0.0
  %v3426 = vmax.f32 %v3422, 0.0
  %v3427 = vld [vmem:[%s5] sm:$0xff]
  %v3428 = vld [vmem:[%s6] sm:$0xff]
  %3430 = vset.pattern.permute.xlu0 0
  %3431 = vperm.xlu0 %3430, %v3428
  %v3432 = vpop.permute.xlu0 %3431
  %v3435 = vsel %vm1948, %v3427, 0
  %3437 = vmatprep.subr.mxu0 0.0
  %3438 = vmatpush1.msra.mxu0 %v3423
  %3439 = vmatprep.subr.mxu0 0.0
  %3440 = vmatpush1.msra.mxu0 %v3424
  %3441 = vmatprep.subr.mxu0 0.0
  %3442 = vmatpush1.msra.mxu0 %v3425
  %3443 = vmatprep.subr.mxu0 0.0
  %3444 = vmatpush1.msra.mxu0 %v3426
  %3445 = vmatprep.subr.mxu0 0.0
  %3446 = vmatpush1.msra.mxu0 0.0
  %3447 = vmatprep.subr.mxu0 0.0
  %3448 = vmatpush1.msra.mxu0 0.0
  %3449 = vmatprep.subr.mxu0 0.0
  %3450 = vmatpush1.msra.mxu0 0.0
  %3451 = vmatprep.subr.mxu0 0.0
  %3452 = vmatpush1.msra.mxu0 0.0
  %3453 = vmatprep.subr.mxu0 0.0
  %3454 = vmatpush1.msra.mxu0 0.0
  %3455 = vmatprep.subr.mxu0 0.0
  %3456 = vmatpush1.msra.mxu0 0.0
  %3457 = vmatprep.subr.mxu0 0.0
  %3458 = vmatpush1.msra.mxu0 0.0
  %3459 = vmatprep.subr.mxu0 0.0
  %3460 = vmatpush1.msra.mxu0 0.0
  %3461 = vmatprep.subr.mxu0 0.0
  %3462 = vmatpush1.msra.mxu0 0.0
  %3463 = vmatprep.subr.mxu0 0.0
  %3464 = vmatpush1.msra.mxu0 0.0
  %3465 = vmatprep.subr.mxu0 0.0
  %3466 = vmatpush1.msra.mxu0 0.0
  %3467 = vmatprep.subr.mxu0 0.0
  %3468 = vmatpush1.msra.mxu0 0.0
  %3469 = vmatprep.subr.mxu0 0.0
  %3470 = vmatpush1.msra.mxu0 0.0
  %3471 = vmatprep.subr.mxu0 0.0
  %3472 = vmatpush1.msra.mxu0 0.0
  %3473 = vmatprep.subr.mxu0 0.0
  %3474 = vmatpush1.msra.mxu0 0.0
  %3475 = vmatprep.subr.mxu0 0.0
  %3476 = vmatpush1.msra.mxu0 0.0
  %3477 = vmatprep.subr.mxu0 0.0
  %3478 = vmatpush1.msra.mxu0 0.0
  %3479 = vmatprep.subr.mxu0 0.0
  %3480 = vmatpush1.msra.mxu0 0.0
  %3481 = vmatprep.subr.mxu0 0.0
  %3482 = vmatpush1.msra.mxu0 0.0
  %3483 = vmatprep.subr.mxu0 0.0
  %3484 = vmatpush1.msra.mxu0 0.0
  %3485 = vmatprep.subr.mxu0 0.0
  %3486 = vmatpush1.msra.mxu0 0.0
  %3487 = vmatprep.subr.mxu0 0.0
  %3488 = vmatpush1.msra.mxu0 0.0
  %3489 = vmatprep.subr.mxu0 0.0
  %3490 = vmatpush1.msra.mxu0 0.0
  %3491 = vmatprep.subr.mxu0 0.0
  %3492 = vmatpush1.msra.mxu0 0.0
  %3493 = vmatprep.subr.mxu0 0.0
  %3494 = vmatpush1.msra.mxu0 0.0
  %3495 = vmatprep.subr.mxu0 0.0
  %3496 = vmatpush1.msra.mxu0 0.0
  %3497 = vmatprep.subr.mxu0 0.0
  %3498 = vmatpush1.msra.mxu0 0.0
  %3499 = vmatprep.subr.mxu0 0.0
  %3500 = vmatpush1.msra.mxu0 0.0
  %3501 = vmatprep.mubr.f32.mxu0 0.0
  %3502 = vmatmul.mubr.f32.gmra.mrb[0].mxu0 %v3435
  %v3503 = vpop.f32.mrb[0].mxu0
  %v3504 = vadd.f32 %v3432, %v3503
  %v3505 = vpop.f32.mrb[0].mxu0
  %3506 = vdwg.mxu0
  %vm3507 = vcmask 15360
  %3508 = vst.msk [vmem:[%s7] sm:$0xff] %vm3507, %v3504
  // Predicated region
  $region30: #{agentnet_forward.1} parent=0 // pred_check
    _
  $region31: #{agentnet_forward.1} parent=0 // pred_check_branch
    %3510 = sbr.rel (0) target = $region33
  $region32: #{agentnet_forward.1} parent=0 // pred_region
    _
  $region33: #{agentnet_forward.1} parent=0 // pred_fallthru
    _
  // Predicated region
  $region34: #{agentnet_forward.1} parent=0 // pred_check
    _
  $region35: #{agentnet_forward.1} parent=0 // pred_check_branch
    %3512 = sbr.rel (0) target = $region37
  $region36: #{agentnet_forward.1} parent=0 // pred_region
    _
  $region37: #{agentnet_forward.1} parent=0 // pred_fallthru
    _

</llo_original>
